<compile_context>
chip_gen: v7x
topology: tpu7x:2x2x1
jax: 0.10.0
libtpu: 0.0.40
codegen_flags: <defaults>
</compile_context>

<pallas_src>
import math

import jax
import jax.numpy as jnp
from jax import lax
from jax.experimental import pallas as pl
from jax.experimental.pallas import tpu as pltpu


# --------------------------------------------------------------------------
# Fused Pallas kernel: attention (all heads, NB batches) + output projection
# --------------------------------------------------------------------------

def _make_fused_kernel(num_heads):
    def kernel(scale_ref, q_ref, k_ref, v_ref, bias_ref, w_ref, b_ref, o_ref,
               x_scr):
        # q_ref/k_ref/v_ref/o_ref : (NB, L, C)  -- NB batches folded per grid step
        # bias_ref : (H, L, L);  w_ref : (C, C) nn.Linear weight (out, in)
        # b_ref    : (1, C);     x_scr : VMEM (NB, L, C) f32 head-merge slab
        NB, L, C = q_ref.shape
        D = C // num_heads

        scale = scale_ref[0]                              # read SMEM scalar once
        q = q_ref[...].astype(jnp.float32) * scale        # fold scale into q once
        k = k_ref[...].astype(jnp.float32)
        v = v_ref[...].astype(jnp.float32)

        for h in range(num_heads):                        # small static count -> unrolled
            lo = h * D
            qh = q[:, :, lo:lo + D]                       # (NB, L, D)
            kh = k[:, :, lo:lo + D]
            vh = v[:, :, lo:lo + D]
            # batched scores over the folded batches: (NB, L, L)
            s = jnp.einsum("bqd,bkd->bqk", qh, kh,
                           preferred_element_type=jnp.float32)
            s = s + bias_ref[h]                           # broadcast (L, L) over NB
            s = s - jnp.max(s, axis=-1, keepdims=True)
            p = jnp.exp(s)
            # exact division: approx reciprocal broke 1e-3 parity with PyTorch
            p = p / jnp.sum(p, axis=-1, keepdims=True)
            # attn_drop is identity at inference time.
            oh = jnp.einsum("bqk,bkd->bqd", p, vh,
                            preferred_element_type=jnp.float32)
            # head merge == x.transpose(1, 2).reshape(B, L, C): write straight
            # into the lane slot of the VMEM slab (no concatenate / lane copies)
            x_scr[:, :, lo:lo + D] = oh

        # output projection on one lane-dense (NB*L, C) slab:
        # contract C of x against in_features of w (no explicit .T)
        x = x_scr[...].reshape(NB * L, C)
        y = lax.dot_general(x, w_ref[...].astype(jnp.float32),
                            (((1,), (1,)), ((), ())),
                            preferred_element_type=jnp.float32) + b_ref[...]
        # proj_drop is identity at inference time.
        o_ref[...] = y.reshape(NB, L, C).astype(o_ref.dtype)

    return kernel


# --------------------------------------------------------------------------
# Glue (parameter-derived bias table) in plain JAX
# --------------------------------------------------------------------------

def _relative_position_bias(table, num_heads, h, w):
    """Reproduces RelativePositionBias.forward for H==h, W==w (proxy tokens),
    where the repeat_interleave factors are 1. Returns (num_heads, h*w, h*w)."""
    # NOTE: follows the module exactly (multiplies rel[:,:,0] by 2*h-1); this
    # matches Swin only because the proxy grid is square (h == w).
    coords_h = jnp.arange(h)
    coords_w = jnp.arange(w)
    coords = jnp.stack(jnp.meshgrid(coords_h, coords_w, indexing="ij"))  # (2,h,w)
    coords_flat = coords.reshape(2, -1)                                  # (2,hw)
    rel = coords_flat[:, :, None] - coords_flat[:, None, :]              # (2,hw,hw)
    rel = rel.transpose(1, 2, 0)                                         # (hw,hw,2)
    rel = rel.at[:, :, 0].add(h - 1)
    rel = rel.at[:, :, 1].add(w - 1)
    rel = rel.at[:, :, 0].multiply(2 * h - 1)
    idx = rel.sum(-1)                                                    # (hw,hw)
    bias = table[idx.reshape(-1)].reshape(h * w, h * w, num_heads)
    return bias.transpose(2, 0, 1).astype(jnp.float32)                   # (nh,hw,hw)


def local_proxy_attention(qkv, params, *, num_heads, reso, proxy_downscale,
                          rel_pos=True, batches_per_step=None):
    _, B, L, C = qkv.shape
    # No head split / transpose in the wrapper: feed (NB, L, C) blocks (lane dim
    # = C) and slice per head inside the kernel.
    q, k, v = qkv[0], qkv[1], qkv[2]

    if batches_per_step is None:
        # Amortize the ~0.35us per-grid-step pipeline overhead across batches
        # while keeping >=2 grid steps (both v7x TensorCores busy).
        # On v5e/v6e (single TensorCore) pass batches_per_step=B for 1 step.
        batches_per_step = max(1, B // 2)
    # keep block tiling even
    while B % batches_per_step:
        batches_per_step -= 1
    nb = batches_per_step
    n_steps = B // nb

    if rel_pos:
        hb = reso // proxy_downscale
        bias = _relative_position_bias(params["rel_pos_table"], num_heads, hb, hb)
    else:
        bias = jnp.zeros((num_heads, L, L), jnp.float32)

    scale = params["scale"].astype(jnp.float32)  # learnable, shape (1,)
    w = params["proj_w"]                         # (C, C) = (out_features, in_features)
    bvec = params["proj_b"].reshape(1, C)

    kernel = _make_fused_kernel(num_heads)
    return pl.pallas_call(
        kernel,
        out_shape=jax.ShapeDtypeStruct((B, L, C), jnp.float32),
        grid_spec=pltpu.PrefetchScalarGridSpec(
            num_scalar_prefetch=0,
            grid=(n_steps,),
            in_specs=[
                pl.BlockSpec(memory_space=pltpu.MemorySpace.SMEM),      # scale
                pl.BlockSpec((nb, L, C), lambda b: (b, 0, 0)),          # q
                pl.BlockSpec((nb, L, C), lambda b: (b, 0, 0)),          # k
                pl.BlockSpec((nb, L, C), lambda b: (b, 0, 0)),          # v
                pl.BlockSpec((num_heads, L, L), lambda b: (0, 0, 0)),   # bias
                pl.BlockSpec((C, C), lambda b: (0, 0)),                 # proj_w
                pl.BlockSpec((1, C), lambda b: (0, 0)),                 # proj_b
            ],
            out_specs=pl.BlockSpec((nb, L, C), lambda b: (b, 0, 0)),
            scratch_shapes=[pltpu.VMEM((nb, L, C), jnp.float32)],       # head-merge slab
        ),
        compiler_params=pltpu.CompilerParams(
            dimension_semantics=("parallel",)),
    )(scale, q, k, v, bias, w, bvec)


# --------------------------------------------------------------------------
# Demo / correctness check
# --------------------------------------------------------------------------

if __name__ == "__main__":
    key = jax.random.PRNGKey(0)

    dim, num_heads = 32, 4
    reso, proxy_downscale = 16, 4
    B = 4                         # even, so the batch-folding path (NB=2) is exercised
    h = w = reso // proxy_downscale
    L = h * w                     # 16 proxy tokens
    head_dim = dim // num_heads

    k1, k2, k3, k4 = jax.random.split(key, 4)
    qkv = jax.random.normal(k1, (3, B, L, dim), jnp.float32)

    bound = 1.0 / math.sqrt(dim)
    params = {
        "scale": jnp.full((1,), head_dim ** (-0.5), jnp.float32),
        "rel_pos_table": 0.02 * jax.random.normal(
            k2, ((2 * h - 1) * (2 * w - 1), num_heads), jnp.float32),
        "proj_w": jax.random.uniform(k3, (dim, dim), jnp.float32, -bound, bound),
        "proj_b": jax.random.uniform(k4, (dim,), jnp.float32, -bound, bound),
    }

    out = local_proxy_attention(qkv, params, num_heads=num_heads, reso=reso,
                                proxy_downscale=proxy_downscale, rel_pos=True)
    out = jax.block_until_ready(out)

    # pure-JAX reference of the PyTorch forward
    def reference(qkv):
        q, k, v = qkv[0], qkv[1], qkv[2]
        sh = lambda t: t.reshape(B, L, num_heads, head_dim).transpose(0, 2, 1, 3)
        qh, kh, vh = sh(q) * params["scale"][0], sh(k), sh(v)
        attn = jnp.einsum("bhqd,bhkd->bhqk", qh, kh)
        attn = attn + _relative_position_bias(
            params["rel_pos_table"], num_heads, h, w)[None]
        attn = jax.nn.softmax(attn, axis=-1)
        x = jnp.einsum("bhqk,bhkd->bhqd", attn, vh)
        x = x.transpose(0, 2, 1, 3).reshape(B, L, dim)
        return x @ params["proj_w"].T + params["proj_b"]

    ref = reference(qkv)
    assert out.shape == (B, L, dim)
    # exact f32 softmax in-kernel; small margin covers MXU multi-pass rounding.
    assert jnp.allclose(out, ref, atol=2e-3, rtol=2e-3), "mismatch vs reference"

    print("KERNEL_OK")
</pallas_src>

<mosaic_0001>
module attributes {stable_mosaic.version = 11 : i64} {
  func.func @kernel(%arg0: i32, %arg1: memref<1xf32, #tpu.memory_space<smem>>, %arg2: memref<2x16x32xf32, #tpu.memory_space<vmem>>, %arg3: memref<2x16x32xf32, #tpu.memory_space<vmem>>, %arg4: memref<2x16x32xf32, #tpu.memory_space<vmem>>, %arg5: memref<4x16x16xf32, #tpu.memory_space<vmem>>, %arg6: memref<32x32xf32, #tpu.memory_space<vmem>>, %arg7: memref<1x32xf32, #tpu.memory_space<vmem>>, %arg8: memref<2x16x32xf32, #tpu.memory_space<vmem>>, %arg9: memref<2x16x32xf32, #tpu.memory_space<vmem>>) attributes {dimension_semantics = [#tpu.dimension_semantics<parallel>], iteration_bounds = array<i64: 2>, scalar_prefetch = 0 : i64, scratch_operands = 1 : i64, tpu.core_type = #tpu.core_type<tc>, window_params = [{transform_indices = @transform_0, window_bounds = array<i64: 1>}, {transform_indices = @transform_1, window_bounds = array<i64: 2, 16, 32>}, {transform_indices = @transform_2, window_bounds = array<i64: 2, 16, 32>}, {transform_indices = @transform_3, window_bounds = array<i64: 2, 16, 32>}, {pipeline_mode = #tpu.pipeline_mode<synchronous>, transform_indices = @transform_4, window_bounds = array<i64: 4, 16, 16>}, {pipeline_mode = #tpu.pipeline_mode<synchronous>, transform_indices = @transform_5, window_bounds = array<i64: 32, 32>}, {pipeline_mode = #tpu.pipeline_mode<synchronous>, transform_indices = @transform_6, window_bounds = array<i64: 1, 32>}, {transform_indices = @transform_7, window_bounds = array<i64: 2, 16, 32>}]} {
    %c0 = arith.constant 0 : index
    %0 = memref.load %arg1[%c0] : memref<1xf32, #tpu.memory_space<smem>>
    %c0_0 = arith.constant 0 : index
    %c0_1 = arith.constant 0 : index
    %c0_2 = arith.constant 0 : index
    %1 = vector.load %arg2[%c0_0, %c0_1, %c0_2] : memref<2x16x32xf32, #tpu.memory_space<vmem>>, vector<2x16x32xf32>
    %2 = vector.broadcast %0 : f32 to vector<2x16x32xf32>
    %3 = arith.mulf %1, %2 : vector<2x16x32xf32>
    %c0_3 = arith.constant 0 : index
    %c0_4 = arith.constant 0 : index
    %c0_5 = arith.constant 0 : index
    %4 = vector.load %arg3[%c0_3, %c0_4, %c0_5] : memref<2x16x32xf32, #tpu.memory_space<vmem>>, vector<2x16x32xf32>
    %c0_6 = arith.constant 0 : index
    %c0_7 = arith.constant 0 : index
    %c0_8 = arith.constant 0 : index
    %5 = vector.load %arg4[%c0_6, %c0_7, %c0_8] : memref<2x16x32xf32, #tpu.memory_space<vmem>>, vector<2x16x32xf32>
    %6 = vector.extract_strided_slice %3 {offsets = [0, 0, 0], sizes = [2, 16, 8], strides = [1, 1, 1]} : vector<2x16x32xf32> to vector<2x16x8xf32>
    %7 = vector.extract_strided_slice %4 {offsets = [0, 0, 0], sizes = [2, 16, 8], strides = [1, 1, 1]} : vector<2x16x32xf32> to vector<2x16x8xf32>
    %8 = vector.extract_strided_slice %5 {offsets = [0, 0, 0], sizes = [2, 16, 8], strides = [1, 1, 1]} : vector<2x16x32xf32> to vector<2x16x8xf32>
    "tpu.trace_start"() <{level = 10 : i32, message = "bqd,bkd->bqk"}> : () -> ()
    %cst = arith.constant dense<0.000000e+00> : vector<2x16x16xf32>
    %9 = tpu.matmul %6, %7, %cst {dimension_numbers = #tpu.dot_dimension_numbers<[2], [2], [1], [1], [0, 0, 0, 1, 1, 1], [0], [0]>} : vector<2x16x8xf32>, vector<2x16x8xf32>, vector<2x16x16xf32> -> vector<2x16x16xf32>
    "tpu.trace_stop"() : () -> ()
    %c0_9 = arith.constant 0 : index
    %c0_10 = arith.constant 0 : index
    %c0_11 = arith.constant 0 : index
    %10 = vector.load %arg5[%c0_9, %c0_10, %c0_11] : memref<4x16x16xf32, #tpu.memory_space<vmem>>, vector<1x16x16xf32>
    %11 = vector.shape_cast %10 : vector<1x16x16xf32> to vector<16x16xf32>
    %12 = vector.shape_cast %11 : vector<16x16xf32> to vector<1x16x16xf32>
    %13 = vector.broadcast %12 : vector<1x16x16xf32> to vector<2x16x16xf32>
    %14 = arith.addf %9, %13 : vector<2x16x16xf32>
    %cst_12 = arith.constant dense<0xFF800000> : vector<2x16xf32>
    %15 = vector.multi_reduction <maximumf>, %14, %cst_12 [2] : vector<2x16x16xf32> to vector<2x16xf32>
    %16 = vector.shape_cast %15 : vector<2x16xf32> to vector<2x16x1xf32>
    %17 = vector.broadcast %16 : vector<2x16x1xf32> to vector<2x16x16xf32>
    %18 = arith.subf %14, %17 : vector<2x16x16xf32>
    %19 = math.exp %18 : vector<2x16x16xf32>
    %cst_13 = arith.constant dense<0.000000e+00> : vector<2x16xf32>
    %20 = vector.multi_reduction <add>, %19, %cst_13 [2] : vector<2x16x16xf32> to vector<2x16xf32>
    %21 = vector.shape_cast %20 : vector<2x16xf32> to vector<2x16x1xf32>
    %22 = vector.broadcast %21 : vector<2x16x1xf32> to vector<2x16x16xf32>
    %23 = arith.divf %19, %22 : vector<2x16x16xf32>
    "tpu.trace_start"() <{level = 10 : i32, message = "bqk,bkd->bqd"}> : () -> ()
    %cst_14 = arith.constant dense<0.000000e+00> : vector<2x16x8xf32>
    %24 = tpu.matmul %23, %8, %cst_14 {dimension_numbers = #tpu.dot_dimension_numbers<[2], [1], [1], [2], [0, 0, 0, 1, 1, 2], [0], [0]>} : vector<2x16x16xf32>, vector<2x16x8xf32>, vector<2x16x8xf32> -> vector<2x16x8xf32>
    "tpu.trace_stop"() : () -> ()
    %c0_15 = arith.constant 0 : index
    %c0_16 = arith.constant 0 : index
    %c0_17 = arith.constant 0 : index
    %25 = vector.load %arg9[%c0_15, %c0_16, %c0_17] : memref<2x16x32xf32, #tpu.memory_space<vmem>>, vector<2x16x8xf32>
    tpu.vector_store %arg9[%c0_15, %c0_16, %c0_17], %24 {strides = array<i32>} : memref<2x16x32xf32, #tpu.memory_space<vmem>>, vector<2x16x8xf32>,
    %26 = vector.extract_strided_slice %3 {offsets = [0, 0, 8], sizes = [2, 16, 8], strides = [1, 1, 1]} : vector<2x16x32xf32> to vector<2x16x8xf32>
    %27 = vector.extract_strided_slice %4 {offsets = [0, 0, 8], sizes = [2, 16, 8], strides = [1, 1, 1]} : vector<2x16x32xf32> to vector<2x16x8xf32>
    %28 = vector.extract_strided_slice %5 {offsets = [0, 0, 8], sizes = [2, 16, 8], strides = [1, 1, 1]} : vector<2x16x32xf32> to vector<2x16x8xf32>
    "tpu.trace_start"() <{level = 10 : i32, message = "bqd,bkd->bqk"}> : () -> ()
    %cst_18 = arith.constant dense<0.000000e+00> : vector<2x16x16xf32>
    %29 = tpu.matmul %26, %27, %cst_18 {dimension_numbers = #tpu.dot_dimension_numbers<[2], [2], [1], [1], [0, 0, 0, 1, 1, 1], [0], [0]>} : vector<2x16x8xf32>, vector<2x16x8xf32>, vector<2x16x16xf32> -> vector<2x16x16xf32>
    "tpu.trace_stop"() : () -> ()
    %c1 = arith.constant 1 : index
    %c0_19 = arith.constant 0 : index
    %c0_20 = arith.constant 0 : index
    %30 = vector.load %arg5[%c1, %c0_19, %c0_20] : memref<4x16x16xf32, #tpu.memory_space<vmem>>, vector<1x16x16xf32>
    %31 = vector.shape_cast %30 : vector<1x16x16xf32> to vector<16x16xf32>
    %32 = vector.shape_cast %31 : vector<16x16xf32> to vector<1x16x16xf32>
    %33 = vector.broadcast %32 : vector<1x16x16xf32> to vector<2x16x16xf32>
    %34 = arith.addf %29, %33 : vector<2x16x16xf32>
    %cst_21 = arith.constant dense<0xFF800000> : vector<2x16xf32>
    %35 = vector.multi_reduction <maximumf>, %34, %cst_21 [2] : vector<2x16x16xf32> to vector<2x16xf32>
    %36 = vector.shape_cast %35 : vector<2x16xf32> to vector<2x16x1xf32>
    %37 = vector.broadcast %36 : vector<2x16x1xf32> to vector<2x16x16xf32>
    %38 = arith.subf %34, %37 : vector<2x16x16xf32>
    %39 = math.exp %38 : vector<2x16x16xf32>
    %cst_22 = arith.constant dense<0.000000e+00> : vector<2x16xf32>
    %40 = vector.multi_reduction <add>, %39, %cst_22 [2] : vector<2x16x16xf32> to vector<2x16xf32>
    %41 = vector.shape_cast %40 : vector<2x16xf32> to vector<2x16x1xf32>
    %42 = vector.broadcast %41 : vector<2x16x1xf32> to vector<2x16x16xf32>
    %43 = arith.divf %39, %42 : vector<2x16x16xf32>
    "tpu.trace_start"() <{level = 10 : i32, message = "bqk,bkd->bqd"}> : () -> ()
    %cst_23 = arith.constant dense<0.000000e+00> : vector<2x16x8xf32>
    %44 = tpu.matmul %43, %28, %cst_23 {dimension_numbers = #tpu.dot_dimension_numbers<[2], [1], [1], [2], [0, 0, 0, 1, 1, 2], [0], [0]>} : vector<2x16x16xf32>, vector<2x16x8xf32>, vector<2x16x8xf32> -> vector<2x16x8xf32>
    "tpu.trace_stop"() : () -> ()
    %c0_24 = arith.constant 0 : index
    %c0_25 = arith.constant 0 : index
    %c8 = arith.constant 8 : index
    %45 = vector.load %arg9[%c0_24, %c0_25, %c8] : memref<2x16x32xf32, #tpu.memory_space<vmem>>, vector<2x16x8xf32>
    tpu.vector_store %arg9[%c0_24, %c0_25, %c8], %44 {strides = array<i32>} : memref<2x16x32xf32, #tpu.memory_space<vmem>>, vector<2x16x8xf32>,
    %46 = vector.extract_strided_slice %3 {offsets = [0, 0, 16], sizes = [2, 16, 8], strides = [1, 1, 1]} : vector<2x16x32xf32> to vector<2x16x8xf32>
    %47 = vector.extract_strided_slice %4 {offsets = [0, 0, 16], sizes = [2, 16, 8], strides = [1, 1, 1]} : vector<2x16x32xf32> to vector<2x16x8xf32>
    %48 = vector.extract_strided_slice %5 {offsets = [0, 0, 16], sizes = [2, 16, 8], strides = [1, 1, 1]} : vector<2x16x32xf32> to vector<2x16x8xf32>
    "tpu.trace_start"() <{level = 10 : i32, message = "bqd,bkd->bqk"}> : () -> ()
    %cst_26 = arith.constant dense<0.000000e+00> : vector<2x16x16xf32>
    %49 = tpu.matmul %46, %47, %cst_26 {dimension_numbers = #tpu.dot_dimension_numbers<[2], [2], [1], [1], [0, 0, 0, 1, 1, 1], [0], [0]>} : vector<2x16x8xf32>, vector<2x16x8xf32>, vector<2x16x16xf32> -> vector<2x16x16xf32>
    "tpu.trace_stop"() : () -> ()
    %c2 = arith.constant 2 : index
    %c0_27 = arith.constant 0 : index
    %c0_28 = arith.constant 0 : index
    %50 = vector.load %arg5[%c2, %c0_27, %c0_28] : memref<4x16x16xf32, #tpu.memory_space<vmem>>, vector<1x16x16xf32>
    %51 = vector.shape_cast %50 : vector<1x16x16xf32> to vector<16x16xf32>
    %52 = vector.shape_cast %51 : vector<16x16xf32> to vector<1x16x16xf32>
    %53 = vector.broadcast %52 : vector<1x16x16xf32> to vector<2x16x16xf32>
    %54 = arith.addf %49, %53 : vector<2x16x16xf32>
    %cst_29 = arith.constant dense<0xFF800000> : vector<2x16xf32>
    %55 = vector.multi_reduction <maximumf>, %54, %cst_29 [2] : vector<2x16x16xf32> to vector<2x16xf32>
    %56 = vector.shape_cast %55 : vector<2x16xf32> to vector<2x16x1xf32>
    %57 = vector.broadcast %56 : vector<2x16x1xf32> to vector<2x16x16xf32>
    %58 = arith.subf %54, %57 : vector<2x16x16xf32>
    %59 = math.exp %58 : vector<2x16x16xf32>
    %cst_30 = arith.constant dense<0.000000e+00> : vector<2x16xf32>
    %60 = vector.multi_reduction <add>, %59, %cst_30 [2] : vector<2x16x16xf32> to vector<2x16xf32>
    %61 = vector.shape_cast %60 : vector<2x16xf32> to vector<2x16x1xf32>
    %62 = vector.broadcast %61 : vector<2x16x1xf32> to vector<2x16x16xf32>
    %63 = arith.divf %59, %62 : vector<2x16x16xf32>
    "tpu.trace_start"() <{level = 10 : i32, message = "bqk,bkd->bqd"}> : () -> ()
    %cst_31 = arith.constant dense<0.000000e+00> : vector<2x16x8xf32>
    %64 = tpu.matmul %63, %48, %cst_31 {dimension_numbers = #tpu.dot_dimension_numbers<[2], [1], [1], [2], [0, 0, 0, 1, 1, 2], [0], [0]>} : vector<2x16x16xf32>, vector<2x16x8xf32>, vector<2x16x8xf32> -> vector<2x16x8xf32>
    "tpu.trace_stop"() : () -> ()
    %c0_32 = arith.constant 0 : index
    %c0_33 = arith.constant 0 : index
    %c16 = arith.constant 16 : index
    %65 = vector.load %arg9[%c0_32, %c0_33, %c16] : memref<2x16x32xf32, #tpu.memory_space<vmem>>, vector<2x16x8xf32>
    tpu.vector_store %arg9[%c0_32, %c0_33, %c16], %64 {strides = array<i32>} : memref<2x16x32xf32, #tpu.memory_space<vmem>>, vector<2x16x8xf32>,
    %66 = vector.extract_strided_slice %3 {offsets = [0, 0, 24], sizes = [2, 16, 8], strides = [1, 1, 1]} : vector<2x16x32xf32> to vector<2x16x8xf32>
    %67 = vector.extract_strided_slice %4 {offsets = [0, 0, 24], sizes = [2, 16, 8], strides = [1, 1, 1]} : vector<2x16x32xf32> to vector<2x16x8xf32>
    %68 = vector.extract_strided_slice %5 {offsets = [0, 0, 24], sizes = [2, 16, 8], strides = [1, 1, 1]} : vector<2x16x32xf32> to vector<2x16x8xf32>
    "tpu.trace_start"() <{level = 10 : i32, message = "bqd,bkd->bqk"}> : () -> ()
    %cst_34 = arith.constant dense<0.000000e+00> : vector<2x16x16xf32>
    %69 = tpu.matmul %66, %67, %cst_34 {dimension_numbers = #tpu.dot_dimension_numbers<[2], [2], [1], [1], [0, 0, 0, 1, 1, 1], [0], [0]>} : vector<2x16x8xf32>, vector<2x16x8xf32>, vector<2x16x16xf32> -> vector<2x16x16xf32>
    "tpu.trace_stop"() : () -> ()
    %c3 = arith.constant 3 : index
    %c0_35 = arith.constant 0 : index
    %c0_36 = arith.constant 0 : index
    %70 = vector.load %arg5[%c3, %c0_35, %c0_36] : memref<4x16x16xf32, #tpu.memory_space<vmem>>, vector<1x16x16xf32>
    %71 = vector.shape_cast %70 : vector<1x16x16xf32> to vector<16x16xf32>
    %72 = vector.shape_cast %71 : vector<16x16xf32> to vector<1x16x16xf32>
    %73 = vector.broadcast %72 : vector<1x16x16xf32> to vector<2x16x16xf32>
    %74 = arith.addf %69, %73 : vector<2x16x16xf32>
    %cst_37 = arith.constant dense<0xFF800000> : vector<2x16xf32>
    %75 = vector.multi_reduction <maximumf>, %74, %cst_37 [2] : vector<2x16x16xf32> to vector<2x16xf32>
    %76 = vector.shape_cast %75 : vector<2x16xf32> to vector<2x16x1xf32>
    %77 = vector.broadcast %76 : vector<2x16x1xf32> to vector<2x16x16xf32>
    %78 = arith.subf %74, %77 : vector<2x16x16xf32>
    %79 = math.exp %78 : vector<2x16x16xf32>
    %cst_38 = arith.constant dense<0.000000e+00> : vector<2x16xf32>
    %80 = vector.multi_reduction <add>, %79, %cst_38 [2] : vector<2x16x16xf32> to vector<2x16xf32>
    %81 = vector.shape_cast %80 : vector<2x16xf32> to vector<2x16x1xf32>
    %82 = vector.broadcast %81 : vector<2x16x1xf32> to vector<2x16x16xf32>
    %83 = arith.divf %79, %82 : vector<2x16x16xf32>
    "tpu.trace_start"() <{level = 10 : i32, message = "bqk,bkd->bqd"}> : () -> ()
    %cst_39 = arith.constant dense<0.000000e+00> : vector<2x16x8xf32>
    %84 = tpu.matmul %83, %68, %cst_39 {dimension_numbers = #tpu.dot_dimension_numbers<[2], [1], [1], [2], [0, 0, 0, 1, 1, 2], [0], [0]>} : vector<2x16x16xf32>, vector<2x16x8xf32>, vector<2x16x8xf32> -> vector<2x16x8xf32>
    "tpu.trace_stop"() : () -> ()
    %c0_40 = arith.constant 0 : index
    %c0_41 = arith.constant 0 : index
    %c24 = arith.constant 24 : index
    %85 = vector.load %arg9[%c0_40, %c0_41, %c24] : memref<2x16x32xf32, #tpu.memory_space<vmem>>, vector<2x16x8xf32>
    tpu.vector_store %arg9[%c0_40, %c0_41, %c24], %84 {strides = array<i32>} : memref<2x16x32xf32, #tpu.memory_space<vmem>>, vector<2x16x8xf32>,
    %c0_42 = arith.constant 0 : index
    %c0_43 = arith.constant 0 : index
    %c0_44 = arith.constant 0 : index
    %86 = vector.load %arg9[%c0_42, %c0_43, %c0_44] : memref<2x16x32xf32, #tpu.memory_space<vmem>>, vector<2x16x32xf32>
    %87 = vector.shape_cast %86 : vector<2x16x32xf32> to vector<32x32xf32>
    %c0_45 = arith.constant 0 : index
    %c0_46 = arith.constant 0 : index
    %88 = vector.load %arg6[%c0_45, %c0_46] : memref<32x32xf32, #tpu.memory_space<vmem>>, vector<32x32xf32>
    %cst_47 = arith.constant dense<0.000000e+00> : vector<32x32xf32>
    %89 = tpu.matmul %87, %88, %cst_47 {dimension_numbers = #tpu.dot_dimension_numbers<[1], [1], [0], [0], [0, 0, 1, 0], [], []>} : vector<32x32xf32>, vector<32x32xf32>, vector<32x32xf32> -> vector<32x32xf32>
    %c0_48 = arith.constant 0 : index
    %c0_49 = arith.constant 0 : index
    %90 = vector.load %arg7[%c0_48, %c0_49] : memref<1x32xf32, #tpu.memory_space<vmem>>, vector<1x32xf32>
    %91 = vector.broadcast %90 : vector<1x32xf32> to vector<32x32xf32>
    %92 = arith.addf %89, %91 : vector<32x32xf32>
    %93 = vector.shape_cast %92 : vector<32x32xf32> to vector<2x16x32xf32>
    %c0_50 = arith.constant 0 : index
    %c0_51 = arith.constant 0 : index
    %c0_52 = arith.constant 0 : index
    %94 = vector.load %arg8[%c0_50, %c0_51, %c0_52] : memref<2x16x32xf32, #tpu.memory_space<vmem>>, vector<2x16x32xf32>
    tpu.vector_store %arg8[%c0_50, %c0_51, %c0_52], %93 {strides = array<i32>} : memref<2x16x32xf32, #tpu.memory_space<vmem>>, vector<2x16x32xf32>,
    return
  }
  func.func @transform_0(%arg0: i32) -> i32 {
    %c0_i32 = arith.constant 0 : i32
    %c0_i32_0 = arith.constant 0 : i32
    return %c0_i32 : i32
  }
  func.func @transform_1(%arg0: i32) -> (i32, i32, i32) {
    %c0_i32 = arith.constant 0 : i32
    %c0_i32_0 = arith.constant 0 : i32
    %c0_i32_1 = arith.constant 0 : i32
    return %arg0, %c0_i32, %c0_i32_0 : i32, i32, i32
  }
  func.func @transform_2(%arg0: i32) -> (i32, i32, i32) {
    %c0_i32 = arith.constant 0 : i32
    %c0_i32_0 = arith.constant 0 : i32
    %c0_i32_1 = arith.constant 0 : i32
    return %arg0, %c0_i32, %c0_i32_0 : i32, i32, i32
  }
  func.func @transform_3(%arg0: i32) -> (i32, i32, i32) {
    %c0_i32 = arith.constant 0 : i32
    %c0_i32_0 = arith.constant 0 : i32
    %c0_i32_1 = arith.constant 0 : i32
    return %arg0, %c0_i32, %c0_i32_0 : i32, i32, i32
  }
  func.func @transform_4(%arg0: i32) -> (i32, i32, i32) {
    %c0_i32 = arith.constant 0 : i32
    %c0_i32_0 = arith.constant 0 : i32
    %c0_i32_1 = arith.constant 0 : i32
    %c0_i32_2 = arith.constant 0 : i32
    return %c0_i32, %c0_i32_0, %c0_i32_1 : i32, i32, i32
  }
  func.func @transform_5(%arg0: i32) -> (i32, i32) {
    %c0_i32 = arith.constant 0 : i32
    %c0_i32_0 = arith.constant 0 : i32
    %c0_i32_1 = arith.constant 0 : i32
    return %c0_i32, %c0_i32_0 : i32, i32
  }
  func.func @transform_6(%arg0: i32) -> (i32, i32) {
    %c0_i32 = arith.constant 0 : i32
    %c0_i32_0 = arith.constant 0 : i32
    %c0_i32_1 = arith.constant 0 : i32
    return %c0_i32, %c0_i32_0 : i32, i32
  }
  func.func @transform_7(%arg0: i32) -> (i32, i32, i32) {
    %c0_i32 = arith.constant 0 : i32
    %c0_i32_0 = arith.constant 0 : i32
    %c0_i32_1 = arith.constant 0 : i32
    return %arg0, %c0_i32, %c0_i32_0 : i32, i32, i32
  }
}

</mosaic_0001>

<llo_original>
// kernel: tpu_custom_call.1
$region0: #{tpu_custom_call.1}
  #allocation0 [shape = 'u32[]', space=smem, size = 0x4, offset = 0x4, fixed_abs, tag = 'smem constant byte address 0x4 - core index']
  #allocation1 [shape = 'u32[144,128]{1,0:T(1,128)}', space=vmem, size = 0x12000, scoped, tag = 'internal scratch']
  #allocation2 [shape = 'f32[2,16,32]{2,1,0:T(8,128)}', space=vmem, size = 0x4000, scoped, tag = 'scratch operand']
  #allocation3 [shape = 'f32[1]{0:T(128)S(6)}', space=smem, size = 0x200, scoped, tag = 'scoped memory for tpu_custom_call.1']
  %s0 = inlined_call_operand.<no memory space> [shape: f32[1], index: 0, kind: input, shape index: {}]
  %s1 = inlined_call_operand.hbm [shape: f32[4,16,32], index: 1, kind: input, shape index: {}]
  %s2 = inlined_call_operand.hbm [shape: f32[4,16,32], index: 2, kind: input, shape index: {}]
  %s3 = inlined_call_operand.hbm [shape: f32[4,16,32], index: 3, kind: input, shape index: {}]
  %s4 = inlined_call_operand.hbm [shape: f32[4,16,16], index: 4, kind: input, shape index: {}]
  %s5 = inlined_call_operand.hbm [shape: f32[32,32], index: 5, kind: input, shape index: {}]
  %s6 = inlined_call_operand.vmem [shape: f32[1,32], index: 6, kind: input, shape index: {}]
  %s7 = inlined_call_operand.hbm [shape: f32[4,16,32], index: 7, kind: output, shape index: {}]
  %s8 = sld [smem:[#allocation0]]
  $region81: #{tpu_custom_call.1} parent=0
    _
  %s10 = ssub.s32 1, %s8
  %s11 = scalar_select 0, %s10, %s8
  %12 = sst [smem:[#allocation3]] %s0
  $region1: #{tpu_custom_call.1} parent=0
    #allocation4 [shape = 'u8[32768]{0}', space=vmem, size = 0x8000, scoped, tag = 'input window, operand 1']
    #allocation5 [shape = 's32[2]{0}', space=sflag, size = 0x8, scoped, tag = 'scoped memory for tpu_custom_call.1']
    #allocation6 [shape = 's32[2]{0}', space=sflag, size = 0x8, scoped, tag = 'scoped memory for tpu_custom_call.1']
    #allocation7 [shape = 'u8[32768]{0}', space=vmem, size = 0x8000, scoped, tag = 'input window, operand 2']
    #allocation8 [shape = 's32[2]{0}', space=sflag, size = 0x8, scoped, tag = 'scoped memory for tpu_custom_call.1']
    #allocation9 [shape = 'u8[32768]{0}', space=vmem, size = 0x8000, scoped, tag = 'input window, operand 3']
    #allocation10 [shape = 'u8[32768]{0}', space=vmem, size = 0x8000, scoped, tag = 'input window, operand 4, single buffered']
    #allocation11 [shape = 's32[1]{0}', space=sflag, size = 0x4, scoped, tag = 'scoped memory for tpu_custom_call.1']
    #allocation12 [shape = 'u8[16384]{0}', space=vmem, size = 0x4000, scoped, tag = 'input window, operand 5, single buffered']
    #allocation13 [shape = 'u8[32768]{0}', space=vmem, size = 0x8000, scoped, tag = 'output window, operand 0']
    %13 = vsyncpa [#allocation5], 0
    %s14 = scalar_lea.sflag [#allocation5], 1
    %15 = vsyncpa %s14, 0
    %16 = vsyncpa [#allocation8], 0
    %s17 = scalar_lea.sflag [#allocation8], 1
    %18 = vsyncpa %s17, 0
    %19 = vsyncpa [#allocation11], 0
    %20 = vsyncpa [#allocation6], 0
    %s21 = scalar_lea.sflag [#allocation6], 1
    %22 = vsyncpa %s21, 0
    loop: start=0, step=1, limit=4
    $region2: #{tpu_custom_call.1} parent=1 // loop_pre_header
      _
    $region3: #{tpu_custom_call.1} parent=1 // loop_header
      %s24 = sphi 0, %s28
      %p25 = scmp.ge.s32.totalorder %s24, 4
      %s32 = sphi 0, %s32
      %s34 = sphi 0, %s32
      %s35 = sphi 0, %s34
      %s49 = sphi 0, %s35
      %s55 = sphi 0, %s57
      %s58 = sphi 0, %s55
      %s59 = sphi 0, %s58
      %s75 = sphi 0, %s59
      %s81 = sphi 0, %s83
      %s84 = sphi 0, %s81
      %s85 = sphi 0, %s84
      %s101 = sphi 0, %s85
      %s107 = sphi 0, %s109
      %s110 = sphi 0, %s107
      %s111 = sphi 0, %s110
      %s127 = sphi 0, %s111
      %s131 = sphi 0, %s131
      %s133 = sphi 0, %s131
      %s134 = sphi 0, %s133
      %s148 = sphi 0, %s134
      %s152 = sphi 0, %s152
      %s154 = sphi 0, %s152
      %s155 = sphi 0, %s154
      %s169 = sphi 0, %s155
      %s173 = sphi 0, %s173
      %s175 = sphi 0, %s173
      %s176 = sphi 0, %s175
      %s190 = sphi 0, %s176
      %s196 = sphi 0, %s198
      %s199 = sphi 0, %s196
      %s200 = sphi 0, %s199
      %s216 = sphi 0, %s200
    $region4: #{tpu_custom_call.1} parent=1 // loop_header_branch
      %27 = sbr.rel (%p25) target = $region8
    $region5: #{tpu_custom_call.1} parent=1 // loop_body
      %s29 = ssub.s32 %s24, 1
      %s30 = ssub.s32 %s24, 2
      %s31 = sadd.s32 %s24, 1
      %s33 = sadd.s32 %s32, 1
      %p36 = scmp.eq.s32.totalorder %s24, 1
      %p37 = scmp.ne.s32.totalorder %s32, %s34
      %p38 = scmp.eq.s32.totalorder %s24, 0
      %p39 = por %p37, %p38
      %p40 = scmp.ne.s32.totalorder %s32, %s34
      %p41 = scmp.eq.s32.totalorder %s29, 1
      %p42 = por %p40, %p41
      %p43 = scmp.ne.s32.totalorder %s34, %s35
      %p44 = scmp.eq.s32.totalorder %s29, 0
      %p45 = por %p43, %p44
      %p46 = scmp.ne.s32.totalorder %s34, %s35
      %p47 = scmp.eq.s32.totalorder %s30, 1
      %p48 = por %p46, %p47
      %p50 = scmp.ne.s32.totalorder %s35, %s49
      %p51 = scmp.eq.s32.totalorder %s30, 0
      %p52 = por %p50, %p51
      %s53 = ssub.s32 %s24, %s31
      %p54 = scmp.eq.s32.totalorder %s53, 0
      %s56 = sadd.s32 %s55, 1
      %s57 = scalar_select %p54, %s55, %s56
      %p60 = pneg %p54
      %p61 = scmp.eq.s32.totalorder %s24, 1
      %p62 = por %p60, %p61
      %p63 = scmp.ne.s32.totalorder %s55, %s58
      %p64 = scmp.eq.s32.totalorder %s24, 0
      %p65 = por %p63, %p64
      %p66 = scmp.ne.s32.totalorder %s55, %s58
      %p67 = scmp.eq.s32.totalorder %s29, 1
      %p68 = por %p66, %p67
      %p69 = scmp.ne.s32.totalorder %s58, %s59
      %p70 = scmp.eq.s32.totalorder %s29, 0
      %p71 = por %p69, %p70
      %p72 = scmp.ne.s32.totalorder %s58, %s59
      %p73 = scmp.eq.s32.totalorder %s30, 1
      %p74 = por %p72, %p73
      %p76 = scmp.ne.s32.totalorder %s59, %s75
      %p77 = scmp.eq.s32.totalorder %s30, 0
      %p78 = por %p76, %p77
      %s79 = ssub.s32 %s24, %s31
      %p80 = scmp.eq.s32.totalorder %s79, 0
      %s82 = sadd.s32 %s81, 1
      %s83 = scalar_select %p80, %s81, %s82
      %p86 = pneg %p80
      %p87 = scmp.eq.s32.totalorder %s24, 1
      %p88 = por %p86, %p87
      %p89 = scmp.ne.s32.totalorder %s81, %s84
      %p90 = scmp.eq.s32.totalorder %s24, 0
      %p91 = por %p89, %p90
      %p92 = scmp.ne.s32.totalorder %s81, %s84
      %p93 = scmp.eq.s32.totalorder %s29, 1
      %p94 = por %p92, %p93
      %p95 = scmp.ne.s32.totalorder %s84, %s85
      %p96 = scmp.eq.s32.totalorder %s29, 0
      %p97 = por %p95, %p96
      %p98 = scmp.ne.s32.totalorder %s84, %s85
      %p99 = scmp.eq.s32.totalorder %s30, 1
      %p100 = por %p98, %p99
      %p102 = scmp.ne.s32.totalorder %s85, %s101
      %p103 = scmp.eq.s32.totalorder %s30, 0
      %p104 = por %p102, %p103
      %s105 = ssub.s32 %s24, %s31
      %p106 = scmp.eq.s32.totalorder %s105, 0
      %s108 = sadd.s32 %s107, 1
      %s109 = scalar_select %p106, %s107, %s108
      %p112 = pneg %p106
      %p113 = scmp.eq.s32.totalorder %s24, 1
      %p114 = por %p112, %p113
      %p115 = scmp.ne.s32.totalorder %s107, %s110
      %p116 = scmp.eq.s32.totalorder %s24, 0
      %p117 = por %p115, %p116
      %p118 = scmp.ne.s32.totalorder %s107, %s110
      %p119 = scmp.eq.s32.totalorder %s29, 1
      %p120 = por %p118, %p119
      %p121 = scmp.ne.s32.totalorder %s110, %s111
      %p122 = scmp.eq.s32.totalorder %s29, 0
      %p123 = por %p121, %p122
      %p124 = scmp.ne.s32.totalorder %s110, %s111
      %p125 = scmp.eq.s32.totalorder %s30, 1
      %p126 = por %p124, %p125
      %p128 = scmp.ne.s32.totalorder %s111, %s127
      %p129 = scmp.eq.s32.totalorder %s30, 0
      %p130 = por %p128, %p129
      %s132 = sadd.s32 %s131, 1
      %p135 = scmp.eq.s32.totalorder %s24, 1
      %p136 = scmp.ne.s32.totalorder %s131, %s133
      %p137 = scmp.eq.s32.totalorder %s24, 0
      %p138 = por %p136, %p137
      %p139 = scmp.ne.s32.totalorder %s131, %s133
      %p140 = scmp.eq.s32.totalorder %s29, 1
      %p141 = por %p139, %p140
      %p142 = scmp.ne.s32.totalorder %s133, %s134
      %p143 = scmp.eq.s32.totalorder %s29, 0
      %p144 = por %p142, %p143
      %p145 = scmp.ne.s32.totalorder %s133, %s134
      %p146 = scmp.eq.s32.totalorder %s30, 1
      %p147 = por %p145, %p146
      %p149 = scmp.ne.s32.totalorder %s134, %s148
      %p150 = scmp.eq.s32.totalorder %s30, 0
      %p151 = por %p149, %p150
      %s153 = sadd.s32 %s152, 1
      %p156 = scmp.eq.s32.totalorder %s24, 1
      %p157 = scmp.ne.s32.totalorder %s152, %s154
      %p158 = scmp.eq.s32.totalorder %s24, 0
      %p159 = por %p157, %p158
      %p160 = scmp.ne.s32.totalorder %s152, %s154
      %p161 = scmp.eq.s32.totalorder %s29, 1
      %p162 = por %p160, %p161
      %p163 = scmp.ne.s32.totalorder %s154, %s155
      %p164 = scmp.eq.s32.totalorder %s29, 0
      %p165 = por %p163, %p164
      %p166 = scmp.ne.s32.totalorder %s154, %s155
      %p167 = scmp.eq.s32.totalorder %s30, 1
      %p168 = por %p166, %p167
      %p170 = scmp.ne.s32.totalorder %s155, %s169
      %p171 = scmp.eq.s32.totalorder %s30, 0
      %p172 = por %p170, %p171
      %s174 = sadd.s32 %s173, 1
      %p177 = scmp.eq.s32.totalorder %s24, 1
      %p178 = scmp.ne.s32.totalorder %s173, %s175
      %p179 = scmp.eq.s32.totalorder %s24, 0
      %p180 = por %p178, %p179
      %p181 = scmp.ne.s32.totalorder %s173, %s175
      %p182 = scmp.eq.s32.totalorder %s29, 1
      %p183 = por %p181, %p182
      %p184 = scmp.ne.s32.totalorder %s175, %s176
      %p185 = scmp.eq.s32.totalorder %s29, 0
      %p186 = por %p184, %p185
      %p187 = scmp.ne.s32.totalorder %s175, %s176
      %p188 = scmp.eq.s32.totalorder %s30, 1
      %p189 = por %p187, %p188
      %p191 = scmp.ne.s32.totalorder %s176, %s190
      %p192 = scmp.eq.s32.totalorder %s30, 0
      %p193 = por %p191, %p192
      %s194 = ssub.s32 %s24, %s31
      %p195 = scmp.eq.s32.totalorder %s194, 0
      %s197 = sadd.s32 %s196, 1
      %s198 = scalar_select %p195, %s196, %s197
      %p201 = pneg %p195
      %p202 = scmp.eq.s32.totalorder %s24, 1
      %p203 = por %p201, %p202
      %p204 = scmp.ne.s32.totalorder %s196, %s199
      %p205 = scmp.eq.s32.totalorder %s24, 0
      %p206 = por %p204, %p205
      %p207 = scmp.ne.s32.totalorder %s196, %s199
      %p208 = scmp.eq.s32.totalorder %s29, 1
      %p209 = por %p207, %p208
      %p210 = scmp.ne.s32.totalorder %s199, %s200
      %p211 = scmp.eq.s32.totalorder %s29, 0
      %p212 = por %p210, %p211
      %p213 = scmp.ne.s32.totalorder %s199, %s200
      %p214 = scmp.eq.s32.totalorder %s30, 1
      %p215 = por %p213, %p214
      %p217 = scmp.ne.s32.totalorder %s200, %s216
      %p218 = scmp.eq.s32.totalorder %s30, 0
      %p219 = por %p217, %p218
      %p220 = scmp.le.s32.totalorder 1, %s24
      %p221 = scmp.lt.s32.totalorder %s24, 3
      %p222 = pnand %p220, %p221
      %p223 = pneg %p222
      // Predicated region
      $region9: #{tpu_custom_call.1} parent=5 // pred_check
        _
      $region10: #{tpu_custom_call.1} parent=5 // pred_check_branch
        %225 = sbr.rel (%p222) target = $region12
      $region11: #{tpu_custom_call.1} parent=5 // pred_region
        %s226 = ssub.s32 %s24, 1
        // Predicated region
        $region13: #{tpu_custom_call.1} parent=11 // pred_check
          %p227 = pneg %p45
        $region14: #{tpu_custom_call.1} parent=11 // pred_check_branch
          %229 = sbr.rel (%p227) target = $region16
        $region15: #{tpu_custom_call.1} parent=11 // pred_region
          _
        $region16: #{tpu_custom_call.1} parent=11 // pred_fallthru
          _
        // Predicated region
        $region17: #{tpu_custom_call.1} parent=11 // pred_check
          %p230 = pneg %p144
        $region18: #{tpu_custom_call.1} parent=11 // pred_check_branch
          %232 = sbr.rel (%p230) target = $region20
        $region19: #{tpu_custom_call.1} parent=11 // pred_region
          %s234 = ssub.s32 1024, 1024
          %235 = vsyncadd [#allocation11], %s234
          %s236 = sshll.u32 [#allocation10], 4
          %s237 = int_to_ptr.vmem [resolvable:$true] %s236
          %242 = dma.hbm_to_vmem [thread:$0]  %s4, 1024, %s237, [#allocation11], 128, 128, 8
        $region20: #{tpu_custom_call.1} parent=11 // pred_fallthru
          _
        // Predicated region
        $region21: #{tpu_custom_call.1} parent=11 // pred_check
          %p243 = pneg %p165
        $region22: #{tpu_custom_call.1} parent=11 // pred_check_branch
          %245 = sbr.rel (%p243) target = $region24
        $region23: #{tpu_custom_call.1} parent=11 // pred_region
          %s247 = ssub.s32 512, 512
          %248 = vsyncadd [#allocation11], %s247
          %s249 = sshll.u32 [#allocation12], 4
          %s250 = int_to_ptr.vmem [resolvable:$true] %s249
          %255 = dma.hbm_to_vmem [thread:$0]  %s5, 512, %s250, [#allocation11], 128, 128, 8
        $region24: #{tpu_custom_call.1} parent=11 // pred_fallthru
          _
        // Predicated region
        $region25: #{tpu_custom_call.1} parent=11 // pred_check
          %p256 = pneg %p186
        $region26: #{tpu_custom_call.1} parent=11 // pred_check_branch
          %258 = sbr.rel (%p256) target = $region28
        $region27: #{tpu_custom_call.1} parent=11 // pred_region
          _
        $region28: #{tpu_custom_call.1} parent=11 // pred_fallthru
          _
      $region12: #{tpu_custom_call.1} parent=5 // pred_fallthru
        _
      %p259 = scmp.lt.s32.totalorder %s24, 2
      // Predicated region
      $region29: #{tpu_custom_call.1} parent=5 // pred_check
        %p260 = pneg %p259
      $region30: #{tpu_custom_call.1} parent=5 // pred_check_branch
        %262 = sbr.rel (%p260) target = $region32
      $region31: #{tpu_custom_call.1} parent=5 // pred_region
        // Predicated region
        $region33: #{tpu_custom_call.1} parent=31 // pred_check
          %p263 = pneg %p65
        $region34: #{tpu_custom_call.1} parent=31 // pred_check_branch
          %265 = sbr.rel (%p263) target = $region36
        $region35: #{tpu_custom_call.1} parent=31 // pred_region
          %s266 = sand.u32 %s55, 1
          %s267 = scalar_lea.sflag [#allocation5], %s266
          %s268 = sand.u32 %s55, 1
          %s269 = smul.addr %s268, 32
          %s270 = scalar_lea.vmem [#allocation4], %s269
          %s271 = smul.u32 2, %s24
          %s273 = ssub.s32 512, 512
          %274 = vsyncadd %s267, %s273
          %s275 = smul.addr %s271, 2
          %s276 = smul.addr %s275, 128
          %s277 = scalar_lea.hbm %s1, %s276
          %s278 = sshll.u32 %s270, 4
          %s279 = int_to_ptr.vmem [resolvable:$true] %s278
          %284 = dma.hbm_to_vmem [thread:$0]  %s277, 512, %s279, %s267, 128, 128, 8
        $region36: #{tpu_custom_call.1} parent=31 // pred_fallthru
          _
        // Predicated region
        $region37: #{tpu_custom_call.1} parent=31 // pred_check
          %p285 = pneg %p91
        $region38: #{tpu_custom_call.1} parent=31 // pred_check_branch
          %287 = sbr.rel (%p285) target = $region40
        $region39: #{tpu_custom_call.1} parent=31 // pred_region
          %s288 = sand.u32 %s24, 1
          %s289 = scalar_lea.sflag [#allocation8], %s288
          %s290 = sand.u32 %s81, 1
          %s291 = smul.addr %s290, 32
          %s292 = scalar_lea.vmem [#allocation7], %s291
          %s293 = smul.u32 2, %s24
          %s295 = ssub.s32 512, 512
          %296 = vsyncadd %s289, %s295
          %s297 = smul.addr %s293, 2
          %s298 = smul.addr %s297, 128
          %s299 = scalar_lea.hbm %s2, %s298
          %s300 = sshll.u32 %s292, 4
          %s301 = int_to_ptr.vmem [resolvable:$true] %s300
          %306 = dma.hbm_to_vmem [thread:$0]  %s299, 512, %s301, %s289, 128, 128, 8
        $region40: #{tpu_custom_call.1} parent=31 // pred_fallthru
          _
        // Predicated region
        $region41: #{tpu_custom_call.1} parent=31 // pred_check
          %p307 = pneg %p117
        $region42: #{tpu_custom_call.1} parent=31 // pred_check_branch
          %309 = sbr.rel (%p307) target = $region44
        $region43: #{tpu_custom_call.1} parent=31 // pred_region
          %s310 = sand.u32 %s24, 1
          %s311 = scalar_lea.sflag [#allocation8], %s310
          %s312 = sand.u32 %s107, 1
          %s313 = smul.addr %s312, 32
          %s314 = scalar_lea.vmem [#allocation9], %s313
          %s315 = smul.u32 2, %s24
          %s317 = ssub.s32 512, 512
          %318 = vsyncadd %s311, %s317
          %s319 = smul.addr %s315, 2
          %s320 = smul.addr %s319, 128
          %s321 = scalar_lea.hbm %s3, %s320
          %s322 = sshll.u32 %s314, 4
          %s323 = int_to_ptr.vmem [resolvable:$true] %s322
          %328 = dma.hbm_to_vmem [thread:$0]  %s321, 512, %s323, %s311, 128, 128, 8
        $region44: #{tpu_custom_call.1} parent=31 // pred_fallthru
          _
      $region32: #{tpu_custom_call.1} parent=5 // pred_fallthru
        _
      %p329 = scmp.le.s32.totalorder 1, %s24
      %p330 = scmp.lt.s32.totalorder %s24, 3
      %p331 = pnand %p329, %p330
      %p332 = pneg %p331
      // Predicated region
      $region45: #{tpu_custom_call.1} parent=5 // pred_check
        _
      $region46: #{tpu_custom_call.1} parent=5 // pred_check_branch
        %334 = sbr.rel (%p331) target = $region48
      $region47: #{tpu_custom_call.1} parent=5 // pred_region
        %s335 = ssub.s32 %s24, 1
        %s336 = sand.u32 %s58, 1
        %s337 = scalar_lea.sflag [#allocation5], %s336
        %s338 = sand.u32 %s58, 1
        %s339 = smul.addr %s338, 32
        %s340 = scalar_lea.vmem [#allocation4], %s339
        // Predicated region
        $region49: #{tpu_custom_call.1} parent=47 // pred_check
          %p341 = pneg %p71
        $region50: #{tpu_custom_call.1} parent=47 // pred_check_branch
          %343 = sbr.rel (%p341) target = $region52
        $region51: #{tpu_custom_call.1} parent=47 // pred_region
          %344 = dma.done %s337, 512
        $region52: #{tpu_custom_call.1} parent=47 // pred_fallthru
          _
        %s345 = sand.u32 %s29, 1
        %s346 = scalar_lea.sflag [#allocation8], %s345
        %s347 = sand.u32 %s84, 1
        %s348 = smul.addr %s347, 32
        %s349 = scalar_lea.vmem [#allocation7], %s348
        // Predicated region
        $region53: #{tpu_custom_call.1} parent=47 // pred_check
          %p350 = pneg %p97
        $region54: #{tpu_custom_call.1} parent=47 // pred_check_branch
          %352 = sbr.rel (%p350) target = $region56
        $region55: #{tpu_custom_call.1} parent=47 // pred_region
          %353 = dma.done %s346, 512
        $region56: #{tpu_custom_call.1} parent=47 // pred_fallthru
          _
        %s354 = sand.u32 %s29, 1
        %s355 = scalar_lea.sflag [#allocation8], %s354
        %s356 = sand.u32 %s110, 1
        %s357 = smul.addr %s356, 32
        %s358 = scalar_lea.vmem [#allocation9], %s357
        // Predicated region
        $region57: #{tpu_custom_call.1} parent=47 // pred_check
          %p359 = pneg %p123
        $region58: #{tpu_custom_call.1} parent=47 // pred_check_branch
          %361 = sbr.rel (%p359) target = $region60
        $region59: #{tpu_custom_call.1} parent=47 // pred_region
          %362 = dma.done %s355, 512
        $region60: #{tpu_custom_call.1} parent=47 // pred_fallthru
          _
        // Predicated region
        $region61: #{tpu_custom_call.1} parent=47 // pred_check
          %p363 = pneg %p144
        $region62: #{tpu_custom_call.1} parent=47 // pred_check_branch
          %365 = sbr.rel (%p363) target = $region64
        $region63: #{tpu_custom_call.1} parent=47 // pred_region
          %366 = dma.done [#allocation11], 1024
        $region64: #{tpu_custom_call.1} parent=47 // pred_fallthru
          _
        // Predicated region
        $region65: #{tpu_custom_call.1} parent=47 // pred_check
          %p367 = pneg %p165
        $region66: #{tpu_custom_call.1} parent=47 // pred_check_branch
          %369 = sbr.rel (%p367) target = $region68
        $region67: #{tpu_custom_call.1} parent=47 // pred_region
          %370 = dma.done [#allocation11], 512
        $region68: #{tpu_custom_call.1} parent=47 // pred_fallthru
          _
        %p371 = pneg %p45
        %p372 = pneg %p42
        %s373 = sand.u32 %s58, 1
        %s374 = scalar_lea.sflag [#allocation5], %s373
        %s375 = sand.u32 %s58, 1
        %s376 = smul.addr %s375, 32
        %s377 = scalar_lea.vmem [#allocation4], %s376
        %p378 = pneg %p71
        %p379 = pneg %p68
        %s380 = sand.u32 %s29, 1
        %s381 = scalar_lea.sflag [#allocation8], %s380
        %s382 = sand.u32 %s84, 1
        %s383 = smul.addr %s382, 32
        %s384 = scalar_lea.vmem [#allocation7], %s383
        %p385 = pneg %p97
        %p386 = pneg %p94
        %s387 = sand.u32 %s29, 1
        %s388 = scalar_lea.sflag [#allocation8], %s387
        %s389 = sand.u32 %s110, 1
        %s390 = smul.addr %s389, 32
        %s391 = scalar_lea.vmem [#allocation9], %s390
        %p392 = pneg %p123
        %p393 = pneg %p120
        %p394 = pneg %p144
        %p395 = pneg %p141
        %p396 = pneg %p165
        %p397 = pneg %p162
        %p398 = pneg %p186
        %p399 = pneg %p183
        %p400 = pneg %p212
        %p401 = pneg %p209
        %s402 = sand.u32 %s199, 1
        %s403 = scalar_lea.sflag [#allocation6], %s402
        %s404 = sand.u32 %s199, 1
        %s405 = smul.addr %s404, 32
        %s406 = scalar_lea.vmem [#allocation13], %s405
        %s407 = smul.u32 2, %s29
        %s408 = smul.u32 2, %s29
        %s409 = smul.u32 2, %s29
        %s410 = smul.u32 2, %s29
        %s411 = sld [smem:[#allocation3]]
        %v412 = vld [vmem:[%s340] sm:$0xff]
        %v413 = vld [vmem:[%s340 + $0x8] sm:$0xff]
        %v414 = vld [vmem:[%s340 + $0x10] sm:$0xff]
        %v415 = vld [vmem:[%s340 + $0x18] sm:$0xff]
        %v416 = vstv %s411
        %v417 = vmul.f32 %v412, %v416
        %v418 = vmul.f32 %v413, %v416
        %v419 = vmul.f32 %v414, %v416
        %v420 = vmul.f32 %v415, %v416
        %v421 = vld [vmem:[%s349] sm:$0xff]
        %v422 = vld [vmem:[%s349 + $0x8] sm:$0xff]
        %v423 = vld [vmem:[%s349 + $0x10] sm:$0xff]
        %v424 = vld [vmem:[%s349 + $0x18] sm:$0xff]
        %v425 = vld [vmem:[%s358] sm:$0xff]
        %v426 = vld [vmem:[%s358 + $0x8] sm:$0xff]
        %v427 = vld [vmem:[%s358 + $0x10] sm:$0xff]
        %v428 = vld [vmem:[%s358 + $0x18] sm:$0xff]
        %v429 = vld [vmem:[#allocation10] sm:$0xff]
        %v430 = vld [vmem:[#allocation10 + $0x8] sm:$0xff]
        %vm431 = vcmask 64512
        %v433 = vsel %vm431, %v417, 0
        %v436 = vsel %vm431, %v418, 0
        %v439 = vsel %vm431, %v421, 0
        %v442 = vsel %vm431, %v422, 0
        %444 = vmatprep.subr.mxu0 0.0
        %445 = vmatpush1.xpose.msra.mxu0 %v439
        %446 = vmatprep.subr.mxu0 0.0
        %447 = vmatpush1.xpose.msra.mxu0 %v442
        %448 = vmatprep.subr.mxu0 0.0
        %449 = vmatpush1.xpose.msra.mxu0 0.0
        %450 = vmatprep.subr.mxu0 0.0
        %451 = vmatpush1.xpose.msra.mxu0 0.0
        %452 = vmatprep.subr.mxu0 0.0
        %453 = vmatpush1.xpose.msra.mxu0 0.0
        %454 = vmatprep.subr.mxu0 0.0
        %455 = vmatpush1.xpose.msra.mxu0 0.0
        %456 = vmatprep.subr.mxu0 0.0
        %457 = vmatpush1.xpose.msra.mxu0 0.0
        %458 = vmatprep.subr.mxu0 0.0
        %459 = vmatpush1.xpose.msra.mxu0 0.0
        %460 = vmatprep.subr.mxu0 0.0
        %461 = vmatpush1.xpose.msra.mxu0 0.0
        %462 = vmatprep.subr.mxu0 0.0
        %463 = vmatpush1.xpose.msra.mxu0 0.0
        %464 = vmatprep.subr.mxu0 0.0
        %465 = vmatpush1.xpose.msra.mxu0 0.0
        %466 = vmatprep.subr.mxu0 0.0
        %467 = vmatpush1.xpose.msra.mxu0 0.0
        %468 = vmatprep.subr.mxu0 0.0
        %469 = vmatpush1.xpose.msra.mxu0 0.0
        %470 = vmatprep.subr.mxu0 0.0
        %471 = vmatpush1.xpose.msra.mxu0 0.0
        %472 = vmatprep.subr.mxu0 0.0
        %473 = vmatpush1.xpose.msra.mxu0 0.0
        %474 = vmatprep.subr.mxu0 0.0
        %475 = vmatpush1.xpose.msra.mxu0 0.0
        %476 = vmatprep.subr.mxu0 0.0
        %477 = vmatpush1.xpose.msra.mxu0 0.0
        %478 = vmatprep.subr.mxu0 0.0
        %479 = vmatpush1.xpose.msra.mxu0 0.0
        %480 = vmatprep.subr.mxu0 0.0
        %481 = vmatpush1.xpose.msra.mxu0 0.0
        %482 = vmatprep.subr.mxu0 0.0
        %483 = vmatpush1.xpose.msra.mxu0 0.0
        %484 = vmatprep.subr.mxu0 0.0
        %485 = vmatpush1.xpose.msra.mxu0 0.0
        %486 = vmatprep.subr.mxu0 0.0
        %487 = vmatpush1.xpose.msra.mxu0 0.0
        %488 = vmatprep.subr.mxu0 0.0
        %489 = vmatpush1.xpose.msra.mxu0 0.0
        %490 = vmatprep.subr.mxu0 0.0
        %491 = vmatpush1.xpose.msra.mxu0 0.0
        %492 = vmatprep.subr.mxu0 0.0
        %493 = vmatpush1.xpose.msra.mxu0 0.0
        %494 = vmatprep.subr.mxu0 0.0
        %495 = vmatpush1.xpose.msra.mxu0 0.0
        %496 = vmatprep.subr.mxu0 0.0
        %497 = vmatpush1.xpose.msra.mxu0 0.0
        %498 = vmatprep.subr.mxu0 0.0
        %499 = vmatpush1.xpose.msra.mxu0 0.0
        %500 = vmatprep.subr.mxu0 0.0
        %501 = vmatpush1.xpose.msra.mxu0 0.0
        %502 = vmatprep.subr.mxu0 0.0
        %503 = vmatpush1.xpose.msra.mxu0 0.0
        %504 = vmatprep.subr.mxu0 0.0
        %505 = vmatpush1.xpose.msra.mxu0 0.0
        %506 = vmatprep.subr.mxu0 0.0
        %507 = vmatpush1.xpose.msra.mxu0 0.0
        %508 = vmatprep.mubr.f32.mxu0 0.0
        %509 = vmatmul.mubr.f32.gmra.mrb[0].mxu0 %v433
        %v510 = vpop.f32.mrb[0].mxu0
        %v511 = vadd.f32 %v429, %v510
        %v512 = vpop.f32.mrb[0].mxu0
        %513 = vmatprep.mubr.f32.mxu0 0.0
        %514 = vmatmul.mubr.f32.gmra.mrb[0].mxu0 %v436
        %v515 = vpop.f32.mrb[0].mxu0
        %v516 = vadd.f32 %v430, %v515
        %v517 = vpop.f32.mrb[0].mxu0
        %518 = vdwg.mxu0
        %v520 = vsel %vm431, %v419, 0
        %v523 = vsel %vm431, %v420, 0
        %v526 = vsel %vm431, %v423, 0
        %v529 = vsel %vm431, %v424, 0
        %531 = vmatprep.subr.mxu0 0.0
        %532 = vmatpush1.xpose.msra.mxu0 %v526
        %533 = vmatprep.subr.mxu0 0.0
        %534 = vmatpush1.xpose.msra.mxu0 %v529
        %535 = vmatprep.subr.mxu0 0.0
        %536 = vmatpush1.xpose.msra.mxu0 0.0
        %537 = vmatprep.subr.mxu0 0.0
        %538 = vmatpush1.xpose.msra.mxu0 0.0
        %539 = vmatprep.subr.mxu0 0.0
        %540 = vmatpush1.xpose.msra.mxu0 0.0
        %541 = vmatprep.subr.mxu0 0.0
        %542 = vmatpush1.xpose.msra.mxu0 0.0
        %543 = vmatprep.subr.mxu0 0.0
        %544 = vmatpush1.xpose.msra.mxu0 0.0
        %545 = vmatprep.subr.mxu0 0.0
        %546 = vmatpush1.xpose.msra.mxu0 0.0
        %547 = vmatprep.subr.mxu0 0.0
        %548 = vmatpush1.xpose.msra.mxu0 0.0
        %549 = vmatprep.subr.mxu0 0.0
        %550 = vmatpush1.xpose.msra.mxu0 0.0
        %551 = vmatprep.subr.mxu0 0.0
        %552 = vmatpush1.xpose.msra.mxu0 0.0
        %553 = vmatprep.subr.mxu0 0.0
        %554 = vmatpush1.xpose.msra.mxu0 0.0
        %555 = vmatprep.subr.mxu0 0.0
        %556 = vmatpush1.xpose.msra.mxu0 0.0
        %557 = vmatprep.subr.mxu0 0.0
        %558 = vmatpush1.xpose.msra.mxu0 0.0
        %559 = vmatprep.subr.mxu0 0.0
        %560 = vmatpush1.xpose.msra.mxu0 0.0
        %561 = vmatprep.subr.mxu0 0.0
        %562 = vmatpush1.xpose.msra.mxu0 0.0
        %563 = vmatprep.subr.mxu0 0.0
        %564 = vmatpush1.xpose.msra.mxu0 0.0
        %565 = vmatprep.subr.mxu0 0.0
        %566 = vmatpush1.xpose.msra.mxu0 0.0
        %567 = vmatprep.subr.mxu0 0.0
        %568 = vmatpush1.xpose.msra.mxu0 0.0
        %569 = vmatprep.subr.mxu0 0.0
        %570 = vmatpush1.xpose.msra.mxu0 0.0
        %571 = vmatprep.subr.mxu0 0.0
        %572 = vmatpush1.xpose.msra.mxu0 0.0
        %573 = vmatprep.subr.mxu0 0.0
        %574 = vmatpush1.xpose.msra.mxu0 0.0
        %575 = vmatprep.subr.mxu0 0.0
        %576 = vmatpush1.xpose.msra.mxu0 0.0
        %577 = vmatprep.subr.mxu0 0.0
        %578 = vmatpush1.xpose.msra.mxu0 0.0
        %579 = vmatprep.subr.mxu0 0.0
        %580 = vmatpush1.xpose.msra.mxu0 0.0
        %581 = vmatprep.subr.mxu0 0.0
        %582 = vmatpush1.xpose.msra.mxu0 0.0
        %583 = vmatprep.subr.mxu0 0.0
        %584 = vmatpush1.xpose.msra.mxu0 0.0
        %585 = vmatprep.subr.mxu0 0.0
        %586 = vmatpush1.xpose.msra.mxu0 0.0
        %587 = vmatprep.subr.mxu0 0.0
        %588 = vmatpush1.xpose.msra.mxu0 0.0
        %589 = vmatprep.subr.mxu0 0.0
        %590 = vmatpush1.xpose.msra.mxu0 0.0
        %591 = vmatprep.subr.mxu0 0.0
        %592 = vmatpush1.xpose.msra.mxu0 0.0
        %593 = vmatprep.subr.mxu0 0.0
        %594 = vmatpush1.xpose.msra.mxu0 0.0
        %595 = vmatprep.mubr.f32.mxu0 0.0
        %596 = vmatmul.mubr.f32.gmra.mrb[0].mxu0 %v520
        %v597 = vpop.f32.mrb[0].mxu0
        %v598 = vadd.f32 %v429, %v597
        %v599 = vpop.f32.mrb[0].mxu0
        %600 = vmatprep.mubr.f32.mxu0 0.0
        %601 = vmatmul.mubr.f32.gmra.mrb[0].mxu0 %v523
        %v602 = vpop.f32.mrb[0].mxu0
        %v603 = vadd.f32 %v430, %v602
        %v604 = vpop.f32.mrb[0].mxu0
        %605 = vdwg.mxu0
        %vm606 = vcmask 130048
        %v607 = vsel %vm606, %v511, -inf
        %608 = vmax.xlane.f32.xlu0 %v607
        %v609 = vpop.xlane.xlu0 %608
        %v610 = vsel %vm606, %v516, -inf
        %611 = vmax.xlane.f32.xlu0 %v610
        %v612 = vpop.xlane.xlu0 %611
        %v613 = vsel %vm606, %v598, -inf
        %614 = vmax.xlane.f32.xlu0 %v613
        %v615 = vpop.xlane.xlu0 %614
        %v616 = vsel %vm606, %v603, -inf
        %617 = vmax.xlane.f32.xlu0 %v616
        %v618 = vpop.xlane.xlu0 %617
        %v619 = vsub.f32 %v511, %v609
        %v620 = vsub.f32 %v516, %v612
        %v621 = vsub.f32 %v598, %v615
        %v622 = vsub.f32 %v603, %v618
        %v623 = vmul.f32 %v619, 1.442695
        %v624 = vpow.pop %v623
        %v625 = vmul.f32 %v620, 1.442695
        %v626 = vpow.pop %v625
        %v627 = vmul.f32 %v621, 1.442695
        %v628 = vpow.pop %v627
        %v629 = vmul.f32 %v622, 1.442695
        %v630 = vpow.pop %v629
        %v631 = vsel %vm606, %v624, 0.0
        %632 = vadd.xlane.f32.xlu0 %v631
        %v633 = vpop.xlane.xlu0 %632
        %v634 = vsel %vm606, %v626, 0.0
        %635 = vadd.xlane.f32.xlu0 %v634
        %v636 = vpop.xlane.xlu0 %635
        %v637 = vsel %vm606, %v628, 0.0
        %638 = vadd.xlane.f32.xlu0 %v637
        %v639 = vpop.xlane.xlu0 %638
        %v640 = vsel %vm606, %v630, 0.0
        %641 = vadd.xlane.f32.xlu0 %v640
        %v642 = vpop.xlane.xlu0 %641
        %v643 = vrcp.pop %v633
        %v644 = vmul.f32 %v624, %v643
        %v645 = vrcp.pop %v636
        %v646 = vmul.f32 %v626, %v645
        %v647 = vrcp.pop %v639
        %v648 = vmul.f32 %v628, %v647
        %v649 = vrcp.pop %v642
        %v650 = vmul.f32 %v630, %v649
        %v652 = vsel %vm606, %v644, 0
        %v655 = vsel %vm606, %v646, 0
        %657 = vmatprep.subr.mxu0 0.0
        %658 = vmatpush1.msra.mxu0 %v425
        %659 = vmatprep.subr.mxu0 0.0
        %660 = vmatpush1.msra.mxu0 %v426
        %661 = vmatprep.subr.mxu0 0.0
        %662 = vmatpush1.msra.mxu0 0.0
        %663 = vmatprep.subr.mxu0 0.0
        %664 = vmatpush1.msra.mxu0 0.0
        %665 = vmatprep.subr.mxu0 0.0
        %666 = vmatpush1.msra.mxu0 0.0
        %667 = vmatprep.subr.mxu0 0.0
        %668 = vmatpush1.msra.mxu0 0.0
        %669 = vmatprep.subr.mxu0 0.0
        %670 = vmatpush1.msra.mxu0 0.0
        %671 = vmatprep.subr.mxu0 0.0
        %672 = vmatpush1.msra.mxu0 0.0
        %673 = vmatprep.subr.mxu0 0.0
        %674 = vmatpush1.msra.mxu0 0.0
        %675 = vmatprep.subr.mxu0 0.0
        %676 = vmatpush1.msra.mxu0 0.0
        %677 = vmatprep.subr.mxu0 0.0
        %678 = vmatpush1.msra.mxu0 0.0
        %679 = vmatprep.subr.mxu0 0.0
        %680 = vmatpush1.msra.mxu0 0.0
        %681 = vmatprep.subr.mxu0 0.0
        %682 = vmatpush1.msra.mxu0 0.0
        %683 = vmatprep.subr.mxu0 0.0
        %684 = vmatpush1.msra.mxu0 0.0
        %685 = vmatprep.subr.mxu0 0.0
        %686 = vmatpush1.msra.mxu0 0.0
        %687 = vmatprep.subr.mxu0 0.0
        %688 = vmatpush1.msra.mxu0 0.0
        %689 = vmatprep.subr.mxu0 0.0
        %690 = vmatpush1.msra.mxu0 0.0
        %691 = vmatprep.subr.mxu0 0.0
        %692 = vmatpush1.msra.mxu0 0.0
        %693 = vmatprep.subr.mxu0 0.0
        %694 = vmatpush1.msra.mxu0 0.0
        %695 = vmatprep.subr.mxu0 0.0
        %696 = vmatpush1.msra.mxu0 0.0
        %697 = vmatprep.subr.mxu0 0.0
        %698 = vmatpush1.msra.mxu0 0.0
        %699 = vmatprep.subr.mxu0 0.0
        %700 = vmatpush1.msra.mxu0 0.0
        %701 = vmatprep.subr.mxu0 0.0
        %702 = vmatpush1.msra.mxu0 0.0
        %703 = vmatprep.subr.mxu0 0.0
        %704 = vmatpush1.msra.mxu0 0.0
        %705 = vmatprep.subr.mxu0 0.0
        %706 = vmatpush1.msra.mxu0 0.0
        %707 = vmatprep.subr.mxu0 0.0
        %708 = vmatpush1.msra.mxu0 0.0
        %709 = vmatprep.subr.mxu0 0.0
        %710 = vmatpush1.msra.mxu0 0.0
        %711 = vmatprep.subr.mxu0 0.0
        %712 = vmatpush1.msra.mxu0 0.0
        %713 = vmatprep.subr.mxu0 0.0
        %714 = vmatpush1.msra.mxu0 0.0
        %715 = vmatprep.subr.mxu0 0.0
        %716 = vmatpush1.msra.mxu0 0.0
        %717 = vmatprep.subr.mxu0 0.0
        %718 = vmatpush1.msra.mxu0 0.0
        %719 = vmatprep.subr.mxu0 0.0
        %720 = vmatpush1.msra.mxu0 0.0
        %721 = vmatprep.mubr.f32.mxu0 0.0
        %722 = vmatmul.mubr.f32.gmra.mrb[0].mxu0 %v652
        %v723 = vpop.f32.mrb[0].mxu0
        %v724 = vadd.f32 0.0, %v723
        %v725 = vpop.f32.mrb[0].mxu0
        %726 = vmatprep.mubr.f32.mxu0 0.0
        %727 = vmatmul.mubr.f32.gmra.mrb[0].mxu0 %v655
        %v728 = vpop.f32.mrb[0].mxu0
        %v729 = vadd.f32 0.0, %v728
        %v730 = vpop.f32.mrb[0].mxu0
        %731 = vdwg.mxu0
        %v733 = vsel %vm606, %v648, 0
        %v736 = vsel %vm606, %v650, 0
        %738 = vmatprep.subr.mxu0 0.0
        %739 = vmatpush1.msra.mxu0 %v427
        %740 = vmatprep.subr.mxu0 0.0
        %741 = vmatpush1.msra.mxu0 %v428
        %742 = vmatprep.subr.mxu0 0.0
        %743 = vmatpush1.msra.mxu0 0.0
        %744 = vmatprep.subr.mxu0 0.0
        %745 = vmatpush1.msra.mxu0 0.0
        %746 = vmatprep.subr.mxu0 0.0
        %747 = vmatpush1.msra.mxu0 0.0
        %748 = vmatprep.subr.mxu0 0.0
        %749 = vmatpush1.msra.mxu0 0.0
        %750 = vmatprep.subr.mxu0 0.0
        %751 = vmatpush1.msra.mxu0 0.0
        %752 = vmatprep.subr.mxu0 0.0
        %753 = vmatpush1.msra.mxu0 0.0
        %754 = vmatprep.subr.mxu0 0.0
        %755 = vmatpush1.msra.mxu0 0.0
        %756 = vmatprep.subr.mxu0 0.0
        %757 = vmatpush1.msra.mxu0 0.0
        %758 = vmatprep.subr.mxu0 0.0
        %759 = vmatpush1.msra.mxu0 0.0
        %760 = vmatprep.subr.mxu0 0.0
        %761 = vmatpush1.msra.mxu0 0.0
        %762 = vmatprep.subr.mxu0 0.0
        %763 = vmatpush1.msra.mxu0 0.0
        %764 = vmatprep.subr.mxu0 0.0
        %765 = vmatpush1.msra.mxu0 0.0
        %766 = vmatprep.subr.mxu0 0.0
        %767 = vmatpush1.msra.mxu0 0.0
        %768 = vmatprep.subr.mxu0 0.0
        %769 = vmatpush1.msra.mxu0 0.0
        %770 = vmatprep.subr.mxu0 0.0
        %771 = vmatpush1.msra.mxu0 0.0
        %772 = vmatprep.subr.mxu0 0.0
        %773 = vmatpush1.msra.mxu0 0.0
        %774 = vmatprep.subr.mxu0 0.0
        %775 = vmatpush1.msra.mxu0 0.0
        %776 = vmatprep.subr.mxu0 0.0
        %777 = vmatpush1.msra.mxu0 0.0
        %778 = vmatprep.subr.mxu0 0.0
        %779 = vmatpush1.msra.mxu0 0.0
        %780 = vmatprep.subr.mxu0 0.0
        %781 = vmatpush1.msra.mxu0 0.0
        %782 = vmatprep.subr.mxu0 0.0
        %783 = vmatpush1.msra.mxu0 0.0
        %784 = vmatprep.subr.mxu0 0.0
        %785 = vmatpush1.msra.mxu0 0.0
        %786 = vmatprep.subr.mxu0 0.0
        %787 = vmatpush1.msra.mxu0 0.0
        %788 = vmatprep.subr.mxu0 0.0
        %789 = vmatpush1.msra.mxu0 0.0
        %790 = vmatprep.subr.mxu0 0.0
        %791 = vmatpush1.msra.mxu0 0.0
        %792 = vmatprep.subr.mxu0 0.0
        %793 = vmatpush1.msra.mxu0 0.0
        %794 = vmatprep.subr.mxu0 0.0
        %795 = vmatpush1.msra.mxu0 0.0
        %796 = vmatprep.subr.mxu0 0.0
        %797 = vmatpush1.msra.mxu0 0.0
        %798 = vmatprep.subr.mxu0 0.0
        %799 = vmatpush1.msra.mxu0 0.0
        %800 = vmatprep.subr.mxu0 0.0
        %801 = vmatpush1.msra.mxu0 0.0
        %802 = vmatprep.mubr.f32.mxu0 0.0
        %803 = vmatmul.mubr.f32.gmra.mrb[0].mxu0 %v733
        %v804 = vpop.f32.mrb[0].mxu0
        %v805 = vadd.f32 0.0, %v804
        %v806 = vpop.f32.mrb[0].mxu0
        %807 = vmatprep.mubr.f32.mxu0 0.0
        %808 = vmatmul.mubr.f32.gmra.mrb[0].mxu0 %v736
        %v809 = vpop.f32.mrb[0].mxu0
        %v810 = vadd.f32 0.0, %v809
        %v811 = vpop.f32.mrb[0].mxu0
        %812 = vdwg.mxu0
        %813 = vst.msk [vmem:[#allocation2] sm:$0xff] %vm431, %v724
        %814 = vst.msk [vmem:[#allocation2 + $0x8] sm:$0xff] %vm431, %v729
        %815 = vst.msk [vmem:[#allocation2 + $0x10] sm:$0xff] %vm431, %v805
        %816 = vst.msk [vmem:[#allocation2 + $0x18] sm:$0xff] %vm431, %v810
        %s817 = scalar_lea.vmem [#allocation10], 16
        %v818 = vld [vmem:[%s817] sm:$0xff]
        %v819 = vld [vmem:[%s817 + $0x8] sm:$0xff]
        %820 = vrot.lane.b32.xlu0 %v417, 120
        %v821 = vpop.permute.xlu0 %820
        %822 = vrot.lane.b32.xlu0 %v418, 120
        %v823 = vpop.permute.xlu0 %822
        %824 = vrot.lane.b32.xlu0 %v421, 120
        %v825 = vpop.permute.xlu0 %824
        %826 = vrot.lane.b32.xlu0 %v422, 120
        %v827 = vpop.permute.xlu0 %826
        %v828 = vsel %vm431, %v821, 0
        %v830 = vsel %vm431, %v823, 0
        %v832 = vsel %vm431, %v825, 0
        %v834 = vsel %vm431, %v827, 0
        %836 = vmatprep.subr.mxu0 0.0
        %837 = vmatpush1.xpose.msra.mxu0 %v832
        %838 = vmatprep.subr.mxu0 0.0
        %839 = vmatpush1.xpose.msra.mxu0 %v834
        %840 = vmatprep.subr.mxu0 0.0
        %841 = vmatpush1.xpose.msra.mxu0 0.0
        %842 = vmatprep.subr.mxu0 0.0
        %843 = vmatpush1.xpose.msra.mxu0 0.0
        %844 = vmatprep.subr.mxu0 0.0
        %845 = vmatpush1.xpose.msra.mxu0 0.0
        %846 = vmatprep.subr.mxu0 0.0
        %847 = vmatpush1.xpose.msra.mxu0 0.0
        %848 = vmatprep.subr.mxu0 0.0
        %849 = vmatpush1.xpose.msra.mxu0 0.0
        %850 = vmatprep.subr.mxu0 0.0
        %851 = vmatpush1.xpose.msra.mxu0 0.0
        %852 = vmatprep.subr.mxu0 0.0
        %853 = vmatpush1.xpose.msra.mxu0 0.0
        %854 = vmatprep.subr.mxu0 0.0
        %855 = vmatpush1.xpose.msra.mxu0 0.0
        %856 = vmatprep.subr.mxu0 0.0
        %857 = vmatpush1.xpose.msra.mxu0 0.0
        %858 = vmatprep.subr.mxu0 0.0
        %859 = vmatpush1.xpose.msra.mxu0 0.0
        %860 = vmatprep.subr.mxu0 0.0
        %861 = vmatpush1.xpose.msra.mxu0 0.0
        %862 = vmatprep.subr.mxu0 0.0
        %863 = vmatpush1.xpose.msra.mxu0 0.0
        %864 = vmatprep.subr.mxu0 0.0
        %865 = vmatpush1.xpose.msra.mxu0 0.0
        %866 = vmatprep.subr.mxu0 0.0
        %867 = vmatpush1.xpose.msra.mxu0 0.0
        %868 = vmatprep.subr.mxu0 0.0
        %869 = vmatpush1.xpose.msra.mxu0 0.0
        %870 = vmatprep.subr.mxu0 0.0
        %871 = vmatpush1.xpose.msra.mxu0 0.0
        %872 = vmatprep.subr.mxu0 0.0
        %873 = vmatpush1.xpose.msra.mxu0 0.0
        %874 = vmatprep.subr.mxu0 0.0
        %875 = vmatpush1.xpose.msra.mxu0 0.0
        %876 = vmatprep.subr.mxu0 0.0
        %877 = vmatpush1.xpose.msra.mxu0 0.0
        %878 = vmatprep.subr.mxu0 0.0
        %879 = vmatpush1.xpose.msra.mxu0 0.0
        %880 = vmatprep.subr.mxu0 0.0
        %881 = vmatpush1.xpose.msra.mxu0 0.0
        %882 = vmatprep.subr.mxu0 0.0
        %883 = vmatpush1.xpose.msra.mxu0 0.0
        %884 = vmatprep.subr.mxu0 0.0
        %885 = vmatpush1.xpose.msra.mxu0 0.0
        %886 = vmatprep.subr.mxu0 0.0
        %887 = vmatpush1.xpose.msra.mxu0 0.0
        %888 = vmatprep.subr.mxu0 0.0
        %889 = vmatpush1.xpose.msra.mxu0 0.0
        %890 = vmatprep.subr.mxu0 0.0
        %891 = vmatpush1.xpose.msra.mxu0 0.0
        %892 = vmatprep.subr.mxu0 0.0
        %893 = vmatpush1.xpose.msra.mxu0 0.0
        %894 = vmatprep.subr.mxu0 0.0
        %895 = vmatpush1.xpose.msra.mxu0 0.0
        %896 = vmatprep.subr.mxu0 0.0
        %897 = vmatpush1.xpose.msra.mxu0 0.0
        %898 = vmatprep.subr.mxu0 0.0
        %899 = vmatpush1.xpose.msra.mxu0 0.0
        %900 = vmatprep.mubr.f32.mxu0 0.0
        %901 = vmatmul.mubr.f32.gmra.mrb[0].mxu0 %v828
        %v902 = vpop.f32.mrb[0].mxu0
        %v903 = vadd.f32 %v818, %v902
        %v904 = vpop.f32.mrb[0].mxu0
        %905 = vmatprep.mubr.f32.mxu0 0.0
        %906 = vmatmul.mubr.f32.gmra.mrb[0].mxu0 %v830
        %v907 = vpop.f32.mrb[0].mxu0
        %v908 = vadd.f32 %v819, %v907
        %v909 = vpop.f32.mrb[0].mxu0
        %910 = vdwg.mxu0
        %911 = vrot.lane.b32.xlu0 %v419, 120
        %v912 = vpop.permute.xlu0 %911
        %913 = vrot.lane.b32.xlu0 %v420, 120
        %v914 = vpop.permute.xlu0 %913
        %915 = vrot.lane.b32.xlu0 %v423, 120
        %v916 = vpop.permute.xlu0 %915
        %917 = vrot.lane.b32.xlu0 %v424, 120
        %v918 = vpop.permute.xlu0 %917
        %v919 = vsel %vm431, %v912, 0
        %v921 = vsel %vm431, %v914, 0
        %v923 = vsel %vm431, %v916, 0
        %v925 = vsel %vm431, %v918, 0
        %927 = vmatprep.subr.mxu0 0.0
        %928 = vmatpush1.xpose.msra.mxu0 %v923
        %929 = vmatprep.subr.mxu0 0.0
        %930 = vmatpush1.xpose.msra.mxu0 %v925
        %931 = vmatprep.subr.mxu0 0.0
        %932 = vmatpush1.xpose.msra.mxu0 0.0
        %933 = vmatprep.subr.mxu0 0.0
        %934 = vmatpush1.xpose.msra.mxu0 0.0
        %935 = vmatprep.subr.mxu0 0.0
        %936 = vmatpush1.xpose.msra.mxu0 0.0
        %937 = vmatprep.subr.mxu0 0.0
        %938 = vmatpush1.xpose.msra.mxu0 0.0
        %939 = vmatprep.subr.mxu0 0.0
        %940 = vmatpush1.xpose.msra.mxu0 0.0
        %941 = vmatprep.subr.mxu0 0.0
        %942 = vmatpush1.xpose.msra.mxu0 0.0
        %943 = vmatprep.subr.mxu0 0.0
        %944 = vmatpush1.xpose.msra.mxu0 0.0
        %945 = vmatprep.subr.mxu0 0.0
        %946 = vmatpush1.xpose.msra.mxu0 0.0
        %947 = vmatprep.subr.mxu0 0.0
        %948 = vmatpush1.xpose.msra.mxu0 0.0
        %949 = vmatprep.subr.mxu0 0.0
        %950 = vmatpush1.xpose.msra.mxu0 0.0
        %951 = vmatprep.subr.mxu0 0.0
        %952 = vmatpush1.xpose.msra.mxu0 0.0
        %953 = vmatprep.subr.mxu0 0.0
        %954 = vmatpush1.xpose.msra.mxu0 0.0
        %955 = vmatprep.subr.mxu0 0.0
        %956 = vmatpush1.xpose.msra.mxu0 0.0
        %957 = vmatprep.subr.mxu0 0.0
        %958 = vmatpush1.xpose.msra.mxu0 0.0
        %959 = vmatprep.subr.mxu0 0.0
        %960 = vmatpush1.xpose.msra.mxu0 0.0
        %961 = vmatprep.subr.mxu0 0.0
        %962 = vmatpush1.xpose.msra.mxu0 0.0
        %963 = vmatprep.subr.mxu0 0.0
        %964 = vmatpush1.xpose.msra.mxu0 0.0
        %965 = vmatprep.subr.mxu0 0.0
        %966 = vmatpush1.xpose.msra.mxu0 0.0
        %967 = vmatprep.subr.mxu0 0.0
        %968 = vmatpush1.xpose.msra.mxu0 0.0
        %969 = vmatprep.subr.mxu0 0.0
        %970 = vmatpush1.xpose.msra.mxu0 0.0
        %971 = vmatprep.subr.mxu0 0.0
        %972 = vmatpush1.xpose.msra.mxu0 0.0
        %973 = vmatprep.subr.mxu0 0.0
        %974 = vmatpush1.xpose.msra.mxu0 0.0
        %975 = vmatprep.subr.mxu0 0.0
        %976 = vmatpush1.xpose.msra.mxu0 0.0
        %977 = vmatprep.subr.mxu0 0.0
        %978 = vmatpush1.xpose.msra.mxu0 0.0
        %979 = vmatprep.subr.mxu0 0.0
        %980 = vmatpush1.xpose.msra.mxu0 0.0
        %981 = vmatprep.subr.mxu0 0.0
        %982 = vmatpush1.xpose.msra.mxu0 0.0
        %983 = vmatprep.subr.mxu0 0.0
        %984 = vmatpush1.xpose.msra.mxu0 0.0
        %985 = vmatprep.subr.mxu0 0.0
        %986 = vmatpush1.xpose.msra.mxu0 0.0
        %987 = vmatprep.subr.mxu0 0.0
        %988 = vmatpush1.xpose.msra.mxu0 0.0
        %989 = vmatprep.subr.mxu0 0.0
        %990 = vmatpush1.xpose.msra.mxu0 0.0
        %991 = vmatprep.mubr.f32.mxu0 0.0
        %992 = vmatmul.mubr.f32.gmra.mrb[0].mxu0 %v919
        %v993 = vpop.f32.mrb[0].mxu0
        %v994 = vadd.f32 %v818, %v993
        %v995 = vpop.f32.mrb[0].mxu0
        %996 = vmatprep.mubr.f32.mxu0 0.0
        %997 = vmatmul.mubr.f32.gmra.mrb[0].mxu0 %v921
        %v998 = vpop.f32.mrb[0].mxu0
        %v999 = vadd.f32 %v819, %v998
        %v1000 = vpop.f32.mrb[0].mxu0
        %1001 = vdwg.mxu0
        %v1002 = vsel %vm606, %v903, -inf
        %1003 = vmax.xlane.f32.xlu0 %v1002
        %v1004 = vpop.xlane.xlu0 %1003
        %v1005 = vsel %vm606, %v908, -inf
        %1006 = vmax.xlane.f32.xlu0 %v1005
        %v1007 = vpop.xlane.xlu0 %1006
        %v1008 = vsel %vm606, %v994, -inf
        %1009 = vmax.xlane.f32.xlu0 %v1008
        %v1010 = vpop.xlane.xlu0 %1009
        %v1011 = vsel %vm606, %v999, -inf
        %1012 = vmax.xlane.f32.xlu0 %v1011
        %v1013 = vpop.xlane.xlu0 %1012
        %v1014 = vsub.f32 %v903, %v1004
        %v1015 = vsub.f32 %v908, %v1007
        %v1016 = vsub.f32 %v994, %v1010
        %v1017 = vsub.f32 %v999, %v1013
        %v1018 = vmul.f32 %v1014, 1.442695
        %v1019 = vpow.pop %v1018
        %v1020 = vmul.f32 %v1015, 1.442695
        %v1021 = vpow.pop %v1020
        %v1022 = vmul.f32 %v1016, 1.442695
        %v1023 = vpow.pop %v1022
        %v1024 = vmul.f32 %v1017, 1.442695
        %v1025 = vpow.pop %v1024
        %v1026 = vsel %vm606, %v1019, 0.0
        %1027 = vadd.xlane.f32.xlu0 %v1026
        %v1028 = vpop.xlane.xlu0 %1027
        %v1029 = vsel %vm606, %v1021, 0.0
        %1030 = vadd.xlane.f32.xlu0 %v1029
        %v1031 = vpop.xlane.xlu0 %1030
        %v1032 = vsel %vm606, %v1023, 0.0
        %1033 = vadd.xlane.f32.xlu0 %v1032
        %v1034 = vpop.xlane.xlu0 %1033
        %v1035 = vsel %vm606, %v1025, 0.0
        %1036 = vadd.xlane.f32.xlu0 %v1035
        %v1037 = vpop.xlane.xlu0 %1036
        %v1038 = vrcp.pop %v1028
        %v1039 = vmul.f32 %v1019, %v1038
        %v1040 = vrcp.pop %v1031
        %v1041 = vmul.f32 %v1021, %v1040
        %v1042 = vrcp.pop %v1034
        %v1043 = vmul.f32 %v1023, %v1042
        %v1044 = vrcp.pop %v1037
        %v1045 = vmul.f32 %v1025, %v1044
        %1048 = vrot.lane.b32.xlu0 %v425, 120
        %v1049 = vpop.permute.xlu0 %1048
        %1050 = vrot.lane.b32.xlu0 %v426, 120
        %v1051 = vpop.permute.xlu0 %1050
        %v1055 = vsel %vm606, %v1039, 0
        %v1058 = vsel %vm606, %v1041, 0
        %1060 = vmatprep.subr.mxu0 0.0
        %1061 = vmatpush1.msra.mxu0 %v1049
        %1062 = vmatprep.subr.mxu0 0.0
        %1063 = vmatpush1.msra.mxu0 %v1051
        %1064 = vmatprep.subr.mxu0 0.0
        %1065 = vmatpush1.msra.mxu0 0.0
        %1066 = vmatprep.subr.mxu0 0.0
        %1067 = vmatpush1.msra.mxu0 0.0
        %1068 = vmatprep.subr.mxu0 0.0
        %1069 = vmatpush1.msra.mxu0 0.0
        %1070 = vmatprep.subr.mxu0 0.0
        %1071 = vmatpush1.msra.mxu0 0.0
        %1072 = vmatprep.subr.mxu0 0.0
        %1073 = vmatpush1.msra.mxu0 0.0
        %1074 = vmatprep.subr.mxu0 0.0
        %1075 = vmatpush1.msra.mxu0 0.0
        %1076 = vmatprep.subr.mxu0 0.0
        %1077 = vmatpush1.msra.mxu0 0.0
        %1078 = vmatprep.subr.mxu0 0.0
        %1079 = vmatpush1.msra.mxu0 0.0
        %1080 = vmatprep.subr.mxu0 0.0
        %1081 = vmatpush1.msra.mxu0 0.0
        %1082 = vmatprep.subr.mxu0 0.0
        %1083 = vmatpush1.msra.mxu0 0.0
        %1084 = vmatprep.subr.mxu0 0.0
        %1085 = vmatpush1.msra.mxu0 0.0
        %1086 = vmatprep.subr.mxu0 0.0
        %1087 = vmatpush1.msra.mxu0 0.0
        %1088 = vmatprep.subr.mxu0 0.0
        %1089 = vmatpush1.msra.mxu0 0.0
        %1090 = vmatprep.subr.mxu0 0.0
        %1091 = vmatpush1.msra.mxu0 0.0
        %1092 = vmatprep.subr.mxu0 0.0
        %1093 = vmatpush1.msra.mxu0 0.0
        %1094 = vmatprep.subr.mxu0 0.0
        %1095 = vmatpush1.msra.mxu0 0.0
        %1096 = vmatprep.subr.mxu0 0.0
        %1097 = vmatpush1.msra.mxu0 0.0
        %1098 = vmatprep.subr.mxu0 0.0
        %1099 = vmatpush1.msra.mxu0 0.0
        %1100 = vmatprep.subr.mxu0 0.0
        %1101 = vmatpush1.msra.mxu0 0.0
        %1102 = vmatprep.subr.mxu0 0.0
        %1103 = vmatpush1.msra.mxu0 0.0
        %1104 = vmatprep.subr.mxu0 0.0
        %1105 = vmatpush1.msra.mxu0 0.0
        %1106 = vmatprep.subr.mxu0 0.0
        %1107 = vmatpush1.msra.mxu0 0.0
        %1108 = vmatprep.subr.mxu0 0.0
        %1109 = vmatpush1.msra.mxu0 0.0
        %1110 = vmatprep.subr.mxu0 0.0
        %1111 = vmatpush1.msra.mxu0 0.0
        %1112 = vmatprep.subr.mxu0 0.0
        %1113 = vmatpush1.msra.mxu0 0.0
        %1114 = vmatprep.subr.mxu0 0.0
        %1115 = vmatpush1.msra.mxu0 0.0
        %1116 = vmatprep.subr.mxu0 0.0
        %1117 = vmatpush1.msra.mxu0 0.0
        %1118 = vmatprep.subr.mxu0 0.0
        %1119 = vmatpush1.msra.mxu0 0.0
        %1120 = vmatprep.subr.mxu0 0.0
        %1121 = vmatpush1.msra.mxu0 0.0
        %1122 = vmatprep.subr.mxu0 0.0
        %1123 = vmatpush1.msra.mxu0 0.0
        %1124 = vmatprep.mubr.f32.mxu0 0.0
        %1125 = vmatmul.mubr.f32.gmra.mrb[0].mxu0 %v1055
        %v1126 = vpop.f32.mrb[0].mxu0
        %v1127 = vadd.f32 0.0, %v1126
        %v1128 = vpop.f32.mrb[0].mxu0
        %1129 = vmatprep.mubr.f32.mxu0 0.0
        %1130 = vmatmul.mubr.f32.gmra.mrb[0].mxu0 %v1058
        %v1131 = vpop.f32.mrb[0].mxu0
        %v1132 = vadd.f32 0.0, %v1131
        %v1133 = vpop.f32.mrb[0].mxu0
        %1134 = vdwg.mxu0
        %1137 = vrot.lane.b32.xlu0 %v427, 120
        %v1138 = vpop.permute.xlu0 %1137
        %1139 = vrot.lane.b32.xlu0 %v428, 120
        %v1140 = vpop.permute.xlu0 %1139
        %v1144 = vsel %vm606, %v1043, 0
        %v1147 = vsel %vm606, %v1045, 0
        %1149 = vmatprep.subr.mxu0 0.0
        %1150 = vmatpush1.msra.mxu0 %v1138
        %1151 = vmatprep.subr.mxu0 0.0
        %1152 = vmatpush1.msra.mxu0 %v1140
        %1153 = vmatprep.subr.mxu0 0.0
        %1154 = vmatpush1.msra.mxu0 0.0
        %1155 = vmatprep.subr.mxu0 0.0
        %1156 = vmatpush1.msra.mxu0 0.0
        %1157 = vmatprep.subr.mxu0 0.0
        %1158 = vmatpush1.msra.mxu0 0.0
        %1159 = vmatprep.subr.mxu0 0.0
        %1160 = vmatpush1.msra.mxu0 0.0
        %1161 = vmatprep.subr.mxu0 0.0
        %1162 = vmatpush1.msra.mxu0 0.0
        %1163 = vmatprep.subr.mxu0 0.0
        %1164 = vmatpush1.msra.mxu0 0.0
        %1165 = vmatprep.subr.mxu0 0.0
        %1166 = vmatpush1.msra.mxu0 0.0
        %1167 = vmatprep.subr.mxu0 0.0
        %1168 = vmatpush1.msra.mxu0 0.0
        %1169 = vmatprep.subr.mxu0 0.0
        %1170 = vmatpush1.msra.mxu0 0.0
        %1171 = vmatprep.subr.mxu0 0.0
        %1172 = vmatpush1.msra.mxu0 0.0
        %1173 = vmatprep.subr.mxu0 0.0
        %1174 = vmatpush1.msra.mxu0 0.0
        %1175 = vmatprep.subr.mxu0 0.0
        %1176 = vmatpush1.msra.mxu0 0.0
        %1177 = vmatprep.subr.mxu0 0.0
        %1178 = vmatpush1.msra.mxu0 0.0
        %1179 = vmatprep.subr.mxu0 0.0
        %1180 = vmatpush1.msra.mxu0 0.0
        %1181 = vmatprep.subr.mxu0 0.0
        %1182 = vmatpush1.msra.mxu0 0.0
        %1183 = vmatprep.subr.mxu0 0.0
        %1184 = vmatpush1.msra.mxu0 0.0
        %1185 = vmatprep.subr.mxu0 0.0
        %1186 = vmatpush1.msra.mxu0 0.0
        %1187 = vmatprep.subr.mxu0 0.0
        %1188 = vmatpush1.msra.mxu0 0.0
        %1189 = vmatprep.subr.mxu0 0.0
        %1190 = vmatpush1.msra.mxu0 0.0
        %1191 = vmatprep.subr.mxu0 0.0
        %1192 = vmatpush1.msra.mxu0 0.0
        %1193 = vmatprep.subr.mxu0 0.0
        %1194 = vmatpush1.msra.mxu0 0.0
        %1195 = vmatprep.subr.mxu0 0.0
        %1196 = vmatpush1.msra.mxu0 0.0
        %1197 = vmatprep.subr.mxu0 0.0
        %1198 = vmatpush1.msra.mxu0 0.0
        %1199 = vmatprep.subr.mxu0 0.0
        %1200 = vmatpush1.msra.mxu0 0.0
        %1201 = vmatprep.subr.mxu0 0.0
        %1202 = vmatpush1.msra.mxu0 0.0
        %1203 = vmatprep.subr.mxu0 0.0
        %1204 = vmatpush1.msra.mxu0 0.0
        %1205 = vmatprep.subr.mxu0 0.0
        %1206 = vmatpush1.msra.mxu0 0.0
        %1207 = vmatprep.subr.mxu0 0.0
        %1208 = vmatpush1.msra.mxu0 0.0
        %1209 = vmatprep.subr.mxu0 0.0
        %1210 = vmatpush1.msra.mxu0 0.0
        %1211 = vmatprep.subr.mxu0 0.0
        %1212 = vmatpush1.msra.mxu0 0.0
        %1213 = vmatprep.mubr.f32.mxu0 0.0
        %1214 = vmatmul.mubr.f32.gmra.mrb[0].mxu0 %v1144
        %v1215 = vpop.f32.mrb[0].mxu0
        %v1216 = vadd.f32 0.0, %v1215
        %v1217 = vpop.f32.mrb[0].mxu0
        %1218 = vmatprep.mubr.f32.mxu0 0.0
        %1219 = vmatmul.mubr.f32.gmra.mrb[0].mxu0 %v1147
        %v1220 = vpop.f32.mrb[0].mxu0
        %v1221 = vadd.f32 0.0, %v1220
        %v1222 = vpop.f32.mrb[0].mxu0
        %1223 = vdwg.mxu0
        %1228 = vrot.lane.b32.xlu0 %v1127, 8
        %v1229 = vpop.permute.xlu0 %1228
        %1230 = vrot.lane.b32.xlu0 %v1132, 8
        %v1231 = vpop.permute.xlu0 %1230
        %1232 = vrot.lane.b32.xlu0 %v1216, 8
        %v1233 = vpop.permute.xlu0 %1232
        %1234 = vrot.lane.b32.xlu0 %v1221, 8
        %v1235 = vpop.permute.xlu0 %1234
        %vm1240 = vcmask 130112
        %1241 = vst.msk [vmem:[#allocation2] sm:$0xff] %vm1240, %v1229
        %1242 = vst.msk [vmem:[#allocation2 + $0x8] sm:$0xff] %vm1240, %v1231
        %1243 = vst.msk [vmem:[#allocation2 + $0x10] sm:$0xff] %vm1240, %v1233
        %1244 = vst.msk [vmem:[#allocation2 + $0x18] sm:$0xff] %vm1240, %v1235
        %s1245 = scalar_lea.vmem [#allocation10], 32
        %v1246 = vld [vmem:[%s1245] sm:$0xff]
        %v1247 = vld [vmem:[%s1245 + $0x8] sm:$0xff]
        %1248 = vrot.lane.b32.xlu0 %v417, 112
        %v1249 = vpop.permute.xlu0 %1248
        %1250 = vrot.lane.b32.xlu0 %v418, 112
        %v1251 = vpop.permute.xlu0 %1250
        %1252 = vrot.lane.b32.xlu0 %v421, 112
        %v1253 = vpop.permute.xlu0 %1252
        %1254 = vrot.lane.b32.xlu0 %v422, 112
        %v1255 = vpop.permute.xlu0 %1254
        %v1256 = vsel %vm431, %v1249, 0
        %v1258 = vsel %vm431, %v1251, 0
        %v1260 = vsel %vm431, %v1253, 0
        %v1262 = vsel %vm431, %v1255, 0
        %1264 = vmatprep.subr.mxu0 0.0
        %1265 = vmatpush1.xpose.msra.mxu0 %v1260
        %1266 = vmatprep.subr.mxu0 0.0
        %1267 = vmatpush1.xpose.msra.mxu0 %v1262
        %1268 = vmatprep.subr.mxu0 0.0
        %1269 = vmatpush1.xpose.msra.mxu0 0.0
        %1270 = vmatprep.subr.mxu0 0.0
        %1271 = vmatpush1.xpose.msra.mxu0 0.0
        %1272 = vmatprep.subr.mxu0 0.0
        %1273 = vmatpush1.xpose.msra.mxu0 0.0
        %1274 = vmatprep.subr.mxu0 0.0
        %1275 = vmatpush1.xpose.msra.mxu0 0.0
        %1276 = vmatprep.subr.mxu0 0.0
        %1277 = vmatpush1.xpose.msra.mxu0 0.0
        %1278 = vmatprep.subr.mxu0 0.0
        %1279 = vmatpush1.xpose.msra.mxu0 0.0
        %1280 = vmatprep.subr.mxu0 0.0
        %1281 = vmatpush1.xpose.msra.mxu0 0.0
        %1282 = vmatprep.subr.mxu0 0.0
        %1283 = vmatpush1.xpose.msra.mxu0 0.0
        %1284 = vmatprep.subr.mxu0 0.0
        %1285 = vmatpush1.xpose.msra.mxu0 0.0
        %1286 = vmatprep.subr.mxu0 0.0
        %1287 = vmatpush1.xpose.msra.mxu0 0.0
        %1288 = vmatprep.subr.mxu0 0.0
        %1289 = vmatpush1.xpose.msra.mxu0 0.0
        %1290 = vmatprep.subr.mxu0 0.0
        %1291 = vmatpush1.xpose.msra.mxu0 0.0
        %1292 = vmatprep.subr.mxu0 0.0
        %1293 = vmatpush1.xpose.msra.mxu0 0.0
        %1294 = vmatprep.subr.mxu0 0.0
        %1295 = vmatpush1.xpose.msra.mxu0 0.0
        %1296 = vmatprep.subr.mxu0 0.0
        %1297 = vmatpush1.xpose.msra.mxu0 0.0
        %1298 = vmatprep.subr.mxu0 0.0
        %1299 = vmatpush1.xpose.msra.mxu0 0.0
        %1300 = vmatprep.subr.mxu0 0.0
        %1301 = vmatpush1.xpose.msra.mxu0 0.0
        %1302 = vmatprep.subr.mxu0 0.0
        %1303 = vmatpush1.xpose.msra.mxu0 0.0
        %1304 = vmatprep.subr.mxu0 0.0
        %1305 = vmatpush1.xpose.msra.mxu0 0.0
        %1306 = vmatprep.subr.mxu0 0.0
        %1307 = vmatpush1.xpose.msra.mxu0 0.0
        %1308 = vmatprep.subr.mxu0 0.0
        %1309 = vmatpush1.xpose.msra.mxu0 0.0
        %1310 = vmatprep.subr.mxu0 0.0
        %1311 = vmatpush1.xpose.msra.mxu0 0.0
        %1312 = vmatprep.subr.mxu0 0.0
        %1313 = vmatpush1.xpose.msra.mxu0 0.0
        %1314 = vmatprep.subr.mxu0 0.0
        %1315 = vmatpush1.xpose.msra.mxu0 0.0
        %1316 = vmatprep.subr.mxu0 0.0
        %1317 = vmatpush1.xpose.msra.mxu0 0.0
        %1318 = vmatprep.subr.mxu0 0.0
        %1319 = vmatpush1.xpose.msra.mxu0 0.0
        %1320 = vmatprep.subr.mxu0 0.0
        %1321 = vmatpush1.xpose.msra.mxu0 0.0
        %1322 = vmatprep.subr.mxu0 0.0
        %1323 = vmatpush1.xpose.msra.mxu0 0.0
        %1324 = vmatprep.subr.mxu0 0.0
        %1325 = vmatpush1.xpose.msra.mxu0 0.0
        %1326 = vmatprep.subr.mxu0 0.0
        %1327 = vmatpush1.xpose.msra.mxu0 0.0
        %1328 = vmatprep.mubr.f32.mxu0 0.0
        %1329 = vmatmul.mubr.f32.gmra.mrb[0].mxu0 %v1256
        %v1330 = vpop.f32.mrb[0].mxu0
        %v1331 = vadd.f32 %v1246, %v1330
        %v1332 = vpop.f32.mrb[0].mxu0
        %1333 = vmatprep.mubr.f32.mxu0 0.0
        %1334 = vmatmul.mubr.f32.gmra.mrb[0].mxu0 %v1258
        %v1335 = vpop.f32.mrb[0].mxu0
        %v1336 = vadd.f32 %v1247, %v1335
        %v1337 = vpop.f32.mrb[0].mxu0
        %1338 = vdwg.mxu0
        %1339 = vrot.lane.b32.xlu0 %v419, 112
        %v1340 = vpop.permute.xlu0 %1339
        %1341 = vrot.lane.b32.xlu0 %v420, 112
        %v1342 = vpop.permute.xlu0 %1341
        %1343 = vrot.lane.b32.xlu0 %v423, 112
        %v1344 = vpop.permute.xlu0 %1343
        %1345 = vrot.lane.b32.xlu0 %v424, 112
        %v1346 = vpop.permute.xlu0 %1345
        %v1347 = vsel %vm431, %v1340, 0
        %v1349 = vsel %vm431, %v1342, 0
        %v1351 = vsel %vm431, %v1344, 0
        %v1353 = vsel %vm431, %v1346, 0
        %1355 = vmatprep.subr.mxu0 0.0
        %1356 = vmatpush1.xpose.msra.mxu0 %v1351
        %1357 = vmatprep.subr.mxu0 0.0
        %1358 = vmatpush1.xpose.msra.mxu0 %v1353
        %1359 = vmatprep.subr.mxu0 0.0
        %1360 = vmatpush1.xpose.msra.mxu0 0.0
        %1361 = vmatprep.subr.mxu0 0.0
        %1362 = vmatpush1.xpose.msra.mxu0 0.0
        %1363 = vmatprep.subr.mxu0 0.0
        %1364 = vmatpush1.xpose.msra.mxu0 0.0
        %1365 = vmatprep.subr.mxu0 0.0
        %1366 = vmatpush1.xpose.msra.mxu0 0.0
        %1367 = vmatprep.subr.mxu0 0.0
        %1368 = vmatpush1.xpose.msra.mxu0 0.0
        %1369 = vmatprep.subr.mxu0 0.0
        %1370 = vmatpush1.xpose.msra.mxu0 0.0
        %1371 = vmatprep.subr.mxu0 0.0
        %1372 = vmatpush1.xpose.msra.mxu0 0.0
        %1373 = vmatprep.subr.mxu0 0.0
        %1374 = vmatpush1.xpose.msra.mxu0 0.0
        %1375 = vmatprep.subr.mxu0 0.0
        %1376 = vmatpush1.xpose.msra.mxu0 0.0
        %1377 = vmatprep.subr.mxu0 0.0
        %1378 = vmatpush1.xpose.msra.mxu0 0.0
        %1379 = vmatprep.subr.mxu0 0.0
        %1380 = vmatpush1.xpose.msra.mxu0 0.0
        %1381 = vmatprep.subr.mxu0 0.0
        %1382 = vmatpush1.xpose.msra.mxu0 0.0
        %1383 = vmatprep.subr.mxu0 0.0
        %1384 = vmatpush1.xpose.msra.mxu0 0.0
        %1385 = vmatprep.subr.mxu0 0.0
        %1386 = vmatpush1.xpose.msra.mxu0 0.0
        %1387 = vmatprep.subr.mxu0 0.0
        %1388 = vmatpush1.xpose.msra.mxu0 0.0
        %1389 = vmatprep.subr.mxu0 0.0
        %1390 = vmatpush1.xpose.msra.mxu0 0.0
        %1391 = vmatprep.subr.mxu0 0.0
        %1392 = vmatpush1.xpose.msra.mxu0 0.0
        %1393 = vmatprep.subr.mxu0 0.0
        %1394 = vmatpush1.xpose.msra.mxu0 0.0
        %1395 = vmatprep.subr.mxu0 0.0
        %1396 = vmatpush1.xpose.msra.mxu0 0.0
        %1397 = vmatprep.subr.mxu0 0.0
        %1398 = vmatpush1.xpose.msra.mxu0 0.0
        %1399 = vmatprep.subr.mxu0 0.0
        %1400 = vmatpush1.xpose.msra.mxu0 0.0
        %1401 = vmatprep.subr.mxu0 0.0
        %1402 = vmatpush1.xpose.msra.mxu0 0.0
        %1403 = vmatprep.subr.mxu0 0.0
        %1404 = vmatpush1.xpose.msra.mxu0 0.0
        %1405 = vmatprep.subr.mxu0 0.0
        %1406 = vmatpush1.xpose.msra.mxu0 0.0
        %1407 = vmatprep.subr.mxu0 0.0
        %1408 = vmatpush1.xpose.msra.mxu0 0.0
        %1409 = vmatprep.subr.mxu0 0.0
        %1410 = vmatpush1.xpose.msra.mxu0 0.0
        %1411 = vmatprep.subr.mxu0 0.0
        %1412 = vmatpush1.xpose.msra.mxu0 0.0
        %1413 = vmatprep.subr.mxu0 0.0
        %1414 = vmatpush1.xpose.msra.mxu0 0.0
        %1415 = vmatprep.subr.mxu0 0.0
        %1416 = vmatpush1.xpose.msra.mxu0 0.0
        %1417 = vmatprep.subr.mxu0 0.0
        %1418 = vmatpush1.xpose.msra.mxu0 0.0
        %1419 = vmatprep.mubr.f32.mxu0 0.0
        %1420 = vmatmul.mubr.f32.gmra.mrb[0].mxu0 %v1347
        %v1421 = vpop.f32.mrb[0].mxu0
        %v1422 = vadd.f32 %v1246, %v1421
        %v1423 = vpop.f32.mrb[0].mxu0
        %1424 = vmatprep.mubr.f32.mxu0 0.0
        %1425 = vmatmul.mubr.f32.gmra.mrb[0].mxu0 %v1349
        %v1426 = vpop.f32.mrb[0].mxu0
        %v1427 = vadd.f32 %v1247, %v1426
        %v1428 = vpop.f32.mrb[0].mxu0
        %1429 = vdwg.mxu0
        %v1430 = vsel %vm606, %v1331, -inf
        %1431 = vmax.xlane.f32.xlu0 %v1430
        %v1432 = vpop.xlane.xlu0 %1431
        %v1433 = vsel %vm606, %v1336, -inf
        %1434 = vmax.xlane.f32.xlu0 %v1433
        %v1435 = vpop.xlane.xlu0 %1434
        %v1436 = vsel %vm606, %v1422, -inf
        %1437 = vmax.xlane.f32.xlu0 %v1436
        %v1438 = vpop.xlane.xlu0 %1437
        %v1439 = vsel %vm606, %v1427, -inf
        %1440 = vmax.xlane.f32.xlu0 %v1439
        %v1441 = vpop.xlane.xlu0 %1440
        %v1442 = vsub.f32 %v1331, %v1432
        %v1443 = vsub.f32 %v1336, %v1435
        %v1444 = vsub.f32 %v1422, %v1438
        %v1445 = vsub.f32 %v1427, %v1441
        %v1446 = vmul.f32 %v1442, 1.442695
        %v1447 = vpow.pop %v1446
        %v1448 = vmul.f32 %v1443, 1.442695
        %v1449 = vpow.pop %v1448
        %v1450 = vmul.f32 %v1444, 1.442695
        %v1451 = vpow.pop %v1450
        %v1452 = vmul.f32 %v1445, 1.442695
        %v1453 = vpow.pop %v1452
        %v1454 = vsel %vm606, %v1447, 0.0
        %1455 = vadd.xlane.f32.xlu0 %v1454
        %v1456 = vpop.xlane.xlu0 %1455
        %v1457 = vsel %vm606, %v1449, 0.0
        %1458 = vadd.xlane.f32.xlu0 %v1457
        %v1459 = vpop.xlane.xlu0 %1458
        %v1460 = vsel %vm606, %v1451, 0.0
        %1461 = vadd.xlane.f32.xlu0 %v1460
        %v1462 = vpop.xlane.xlu0 %1461
        %v1463 = vsel %vm606, %v1453, 0.0
        %1464 = vadd.xlane.f32.xlu0 %v1463
        %v1465 = vpop.xlane.xlu0 %1464
        %v1466 = vrcp.pop %v1456
        %v1467 = vmul.f32 %v1447, %v1466
        %v1468 = vrcp.pop %v1459
        %v1469 = vmul.f32 %v1449, %v1468
        %v1470 = vrcp.pop %v1462
        %v1471 = vmul.f32 %v1451, %v1470
        %v1472 = vrcp.pop %v1465
        %v1473 = vmul.f32 %v1453, %v1472
        %1474 = vrot.lane.b32.xlu0 %v425, 112
        %v1475 = vpop.permute.xlu0 %1474
        %1476 = vrot.lane.b32.xlu0 %v426, 112
        %v1477 = vpop.permute.xlu0 %1476
        %v1481 = vsel %vm606, %v1467, 0
        %v1484 = vsel %vm606, %v1469, 0
        %1486 = vmatprep.subr.mxu0 0.0
        %1487 = vmatpush1.msra.mxu0 %v1475
        %1488 = vmatprep.subr.mxu0 0.0
        %1489 = vmatpush1.msra.mxu0 %v1477
        %1490 = vmatprep.subr.mxu0 0.0
        %1491 = vmatpush1.msra.mxu0 0.0
        %1492 = vmatprep.subr.mxu0 0.0
        %1493 = vmatpush1.msra.mxu0 0.0
        %1494 = vmatprep.subr.mxu0 0.0
        %1495 = vmatpush1.msra.mxu0 0.0
        %1496 = vmatprep.subr.mxu0 0.0
        %1497 = vmatpush1.msra.mxu0 0.0
        %1498 = vmatprep.subr.mxu0 0.0
        %1499 = vmatpush1.msra.mxu0 0.0
        %1500 = vmatprep.subr.mxu0 0.0
        %1501 = vmatpush1.msra.mxu0 0.0
        %1502 = vmatprep.subr.mxu0 0.0
        %1503 = vmatpush1.msra.mxu0 0.0
        %1504 = vmatprep.subr.mxu0 0.0
        %1505 = vmatpush1.msra.mxu0 0.0
        %1506 = vmatprep.subr.mxu0 0.0
        %1507 = vmatpush1.msra.mxu0 0.0
        %1508 = vmatprep.subr.mxu0 0.0
        %1509 = vmatpush1.msra.mxu0 0.0
        %1510 = vmatprep.subr.mxu0 0.0
        %1511 = vmatpush1.msra.mxu0 0.0
        %1512 = vmatprep.subr.mxu0 0.0
        %1513 = vmatpush1.msra.mxu0 0.0
        %1514 = vmatprep.subr.mxu0 0.0
        %1515 = vmatpush1.msra.mxu0 0.0
        %1516 = vmatprep.subr.mxu0 0.0
        %1517 = vmatpush1.msra.mxu0 0.0
        %1518 = vmatprep.subr.mxu0 0.0
        %1519 = vmatpush1.msra.mxu0 0.0
        %1520 = vmatprep.subr.mxu0 0.0
        %1521 = vmatpush1.msra.mxu0 0.0
        %1522 = vmatprep.subr.mxu0 0.0
        %1523 = vmatpush1.msra.mxu0 0.0
        %1524 = vmatprep.subr.mxu0 0.0
        %1525 = vmatpush1.msra.mxu0 0.0
        %1526 = vmatprep.subr.mxu0 0.0
        %1527 = vmatpush1.msra.mxu0 0.0
        %1528 = vmatprep.subr.mxu0 0.0
        %1529 = vmatpush1.msra.mxu0 0.0
        %1530 = vmatprep.subr.mxu0 0.0
        %1531 = vmatpush1.msra.mxu0 0.0
        %1532 = vmatprep.subr.mxu0 0.0
        %1533 = vmatpush1.msra.mxu0 0.0
        %1534 = vmatprep.subr.mxu0 0.0
        %1535 = vmatpush1.msra.mxu0 0.0
        %1536 = vmatprep.subr.mxu0 0.0
        %1537 = vmatpush1.msra.mxu0 0.0
        %1538 = vmatprep.subr.mxu0 0.0
        %1539 = vmatpush1.msra.mxu0 0.0
        %1540 = vmatprep.subr.mxu0 0.0
        %1541 = vmatpush1.msra.mxu0 0.0
        %1542 = vmatprep.subr.mxu0 0.0
        %1543 = vmatpush1.msra.mxu0 0.0
        %1544 = vmatprep.subr.mxu0 0.0
        %1545 = vmatpush1.msra.mxu0 0.0
        %1546 = vmatprep.subr.mxu0 0.0
        %1547 = vmatpush1.msra.mxu0 0.0
        %1548 = vmatprep.subr.mxu0 0.0
        %1549 = vmatpush1.msra.mxu0 0.0
        %1550 = vmatprep.mubr.f32.mxu0 0.0
        %1551 = vmatmul.mubr.f32.gmra.mrb[0].mxu0 %v1481
        %v1552 = vpop.f32.mrb[0].mxu0
        %v1553 = vadd.f32 0.0, %v1552
        %v1554 = vpop.f32.mrb[0].mxu0
        %1555 = vmatprep.mubr.f32.mxu0 0.0
        %1556 = vmatmul.mubr.f32.gmra.mrb[0].mxu0 %v1484
        %v1557 = vpop.f32.mrb[0].mxu0
        %v1558 = vadd.f32 0.0, %v1557
        %v1559 = vpop.f32.mrb[0].mxu0
        %1560 = vdwg.mxu0
        %1561 = vrot.lane.b32.xlu0 %v427, 112
        %v1562 = vpop.permute.xlu0 %1561
        %1563 = vrot.lane.b32.xlu0 %v428, 112
        %v1564 = vpop.permute.xlu0 %1563
        %v1568 = vsel %vm606, %v1471, 0
        %v1571 = vsel %vm606, %v1473, 0
        %1573 = vmatprep.subr.mxu0 0.0
        %1574 = vmatpush1.msra.mxu0 %v1562
        %1575 = vmatprep.subr.mxu0 0.0
        %1576 = vmatpush1.msra.mxu0 %v1564
        %1577 = vmatprep.subr.mxu0 0.0
        %1578 = vmatpush1.msra.mxu0 0.0
        %1579 = vmatprep.subr.mxu0 0.0
        %1580 = vmatpush1.msra.mxu0 0.0
        %1581 = vmatprep.subr.mxu0 0.0
        %1582 = vmatpush1.msra.mxu0 0.0
        %1583 = vmatprep.subr.mxu0 0.0
        %1584 = vmatpush1.msra.mxu0 0.0
        %1585 = vmatprep.subr.mxu0 0.0
        %1586 = vmatpush1.msra.mxu0 0.0
        %1587 = vmatprep.subr.mxu0 0.0
        %1588 = vmatpush1.msra.mxu0 0.0
        %1589 = vmatprep.subr.mxu0 0.0
        %1590 = vmatpush1.msra.mxu0 0.0
        %1591 = vmatprep.subr.mxu0 0.0
        %1592 = vmatpush1.msra.mxu0 0.0
        %1593 = vmatprep.subr.mxu0 0.0
        %1594 = vmatpush1.msra.mxu0 0.0
        %1595 = vmatprep.subr.mxu0 0.0
        %1596 = vmatpush1.msra.mxu0 0.0
        %1597 = vmatprep.subr.mxu0 0.0
        %1598 = vmatpush1.msra.mxu0 0.0
        %1599 = vmatprep.subr.mxu0 0.0
        %1600 = vmatpush1.msra.mxu0 0.0
        %1601 = vmatprep.subr.mxu0 0.0
        %1602 = vmatpush1.msra.mxu0 0.0
        %1603 = vmatprep.subr.mxu0 0.0
        %1604 = vmatpush1.msra.mxu0 0.0
        %1605 = vmatprep.subr.mxu0 0.0
        %1606 = vmatpush1.msra.mxu0 0.0
        %1607 = vmatprep.subr.mxu0 0.0
        %1608 = vmatpush1.msra.mxu0 0.0
        %1609 = vmatprep.subr.mxu0 0.0
        %1610 = vmatpush1.msra.mxu0 0.0
        %1611 = vmatprep.subr.mxu0 0.0
        %1612 = vmatpush1.msra.mxu0 0.0
        %1613 = vmatprep.subr.mxu0 0.0
        %1614 = vmatpush1.msra.mxu0 0.0
        %1615 = vmatprep.subr.mxu0 0.0
        %1616 = vmatpush1.msra.mxu0 0.0
        %1617 = vmatprep.subr.mxu0 0.0
        %1618 = vmatpush1.msra.mxu0 0.0
        %1619 = vmatprep.subr.mxu0 0.0
        %1620 = vmatpush1.msra.mxu0 0.0
        %1621 = vmatprep.subr.mxu0 0.0
        %1622 = vmatpush1.msra.mxu0 0.0
        %1623 = vmatprep.subr.mxu0 0.0
        %1624 = vmatpush1.msra.mxu0 0.0
        %1625 = vmatprep.subr.mxu0 0.0
        %1626 = vmatpush1.msra.mxu0 0.0
        %1627 = vmatprep.subr.mxu0 0.0
        %1628 = vmatpush1.msra.mxu0 0.0
        %1629 = vmatprep.subr.mxu0 0.0
        %1630 = vmatpush1.msra.mxu0 0.0
        %1631 = vmatprep.subr.mxu0 0.0
        %1632 = vmatpush1.msra.mxu0 0.0
        %1633 = vmatprep.subr.mxu0 0.0
        %1634 = vmatpush1.msra.mxu0 0.0
        %1635 = vmatprep.subr.mxu0 0.0
        %1636 = vmatpush1.msra.mxu0 0.0
        %1637 = vmatprep.mubr.f32.mxu0 0.0
        %1638 = vmatmul.mubr.f32.gmra.mrb[0].mxu0 %v1568
        %v1639 = vpop.f32.mrb[0].mxu0
        %v1640 = vadd.f32 0.0, %v1639
        %v1641 = vpop.f32.mrb[0].mxu0
        %1642 = vmatprep.mubr.f32.mxu0 0.0
        %1643 = vmatmul.mubr.f32.gmra.mrb[0].mxu0 %v1571
        %v1644 = vpop.f32.mrb[0].mxu0
        %v1645 = vadd.f32 0.0, %v1644
        %v1646 = vpop.f32.mrb[0].mxu0
        %1647 = vdwg.mxu0
        %1652 = vrot.lane.b32.xlu0 %v1553, 16
        %v1653 = vpop.permute.xlu0 %1652
        %1654 = vrot.lane.b32.xlu0 %v1558, 16
        %v1655 = vpop.permute.xlu0 %1654
        %1656 = vrot.lane.b32.xlu0 %v1640, 16
        %v1657 = vpop.permute.xlu0 %1656
        %1658 = vrot.lane.b32.xlu0 %v1645, 16
        %v1659 = vpop.permute.xlu0 %1658
        %vm1664 = vcmask 195712
        %1665 = vst.msk [vmem:[#allocation2] sm:$0xff] %vm1664, %v1653
        %1666 = vst.msk [vmem:[#allocation2 + $0x8] sm:$0xff] %vm1664, %v1655
        %1667 = vst.msk [vmem:[#allocation2 + $0x10] sm:$0xff] %vm1664, %v1657
        %1668 = vst.msk [vmem:[#allocation2 + $0x18] sm:$0xff] %vm1664, %v1659
        %s1669 = scalar_lea.vmem [#allocation10], 48
        %v1670 = vld [vmem:[%s1669] sm:$0xff]
        %v1671 = vld [vmem:[%s1669 + $0x8] sm:$0xff]
        %1672 = vrot.lane.b32.xlu0 %v417, 104
        %v1673 = vpop.permute.xlu0 %1672
        %1674 = vrot.lane.b32.xlu0 %v418, 104
        %v1675 = vpop.permute.xlu0 %1674
        %1676 = vrot.lane.b32.xlu0 %v421, 104
        %v1677 = vpop.permute.xlu0 %1676
        %1678 = vrot.lane.b32.xlu0 %v422, 104
        %v1679 = vpop.permute.xlu0 %1678
        %v1680 = vsel %vm431, %v1673, 0
        %v1682 = vsel %vm431, %v1675, 0
        %v1684 = vsel %vm431, %v1677, 0
        %v1686 = vsel %vm431, %v1679, 0
        %1688 = vmatprep.subr.mxu0 0.0
        %1689 = vmatpush1.xpose.msra.mxu0 %v1684
        %1690 = vmatprep.subr.mxu0 0.0
        %1691 = vmatpush1.xpose.msra.mxu0 %v1686
        %1692 = vmatprep.subr.mxu0 0.0
        %1693 = vmatpush1.xpose.msra.mxu0 0.0
        %1694 = vmatprep.subr.mxu0 0.0
        %1695 = vmatpush1.xpose.msra.mxu0 0.0
        %1696 = vmatprep.subr.mxu0 0.0
        %1697 = vmatpush1.xpose.msra.mxu0 0.0
        %1698 = vmatprep.subr.mxu0 0.0
        %1699 = vmatpush1.xpose.msra.mxu0 0.0
        %1700 = vmatprep.subr.mxu0 0.0
        %1701 = vmatpush1.xpose.msra.mxu0 0.0
        %1702 = vmatprep.subr.mxu0 0.0
        %1703 = vmatpush1.xpose.msra.mxu0 0.0
        %1704 = vmatprep.subr.mxu0 0.0
        %1705 = vmatpush1.xpose.msra.mxu0 0.0
        %1706 = vmatprep.subr.mxu0 0.0
        %1707 = vmatpush1.xpose.msra.mxu0 0.0
        %1708 = vmatprep.subr.mxu0 0.0
        %1709 = vmatpush1.xpose.msra.mxu0 0.0
        %1710 = vmatprep.subr.mxu0 0.0
        %1711 = vmatpush1.xpose.msra.mxu0 0.0
        %1712 = vmatprep.subr.mxu0 0.0
        %1713 = vmatpush1.xpose.msra.mxu0 0.0
        %1714 = vmatprep.subr.mxu0 0.0
        %1715 = vmatpush1.xpose.msra.mxu0 0.0
        %1716 = vmatprep.subr.mxu0 0.0
        %1717 = vmatpush1.xpose.msra.mxu0 0.0
        %1718 = vmatprep.subr.mxu0 0.0
        %1719 = vmatpush1.xpose.msra.mxu0 0.0
        %1720 = vmatprep.subr.mxu0 0.0
        %1721 = vmatpush1.xpose.msra.mxu0 0.0
        %1722 = vmatprep.subr.mxu0 0.0
        %1723 = vmatpush1.xpose.msra.mxu0 0.0
        %1724 = vmatprep.subr.mxu0 0.0
        %1725 = vmatpush1.xpose.msra.mxu0 0.0
        %1726 = vmatprep.subr.mxu0 0.0
        %1727 = vmatpush1.xpose.msra.mxu0 0.0
        %1728 = vmatprep.subr.mxu0 0.0
        %1729 = vmatpush1.xpose.msra.mxu0 0.0
        %1730 = vmatprep.subr.mxu0 0.0
        %1731 = vmatpush1.xpose.msra.mxu0 0.0
        %1732 = vmatprep.subr.mxu0 0.0
        %1733 = vmatpush1.xpose.msra.mxu0 0.0
        %1734 = vmatprep.subr.mxu0 0.0
        %1735 = vmatpush1.xpose.msra.mxu0 0.0
        %1736 = vmatprep.subr.mxu0 0.0
        %1737 = vmatpush1.xpose.msra.mxu0 0.0
        %1738 = vmatprep.subr.mxu0 0.0
        %1739 = vmatpush1.xpose.msra.mxu0 0.0
        %1740 = vmatprep.subr.mxu0 0.0
        %1741 = vmatpush1.xpose.msra.mxu0 0.0
        %1742 = vmatprep.subr.mxu0 0.0
        %1743 = vmatpush1.xpose.msra.mxu0 0.0
        %1744 = vmatprep.subr.mxu0 0.0
        %1745 = vmatpush1.xpose.msra.mxu0 0.0
        %1746 = vmatprep.subr.mxu0 0.0
        %1747 = vmatpush1.xpose.msra.mxu0 0.0
        %1748 = vmatprep.subr.mxu0 0.0
        %1749 = vmatpush1.xpose.msra.mxu0 0.0
        %1750 = vmatprep.subr.mxu0 0.0
        %1751 = vmatpush1.xpose.msra.mxu0 0.0
        %1752 = vmatprep.mubr.f32.mxu0 0.0
        %1753 = vmatmul.mubr.f32.gmra.mrb[0].mxu0 %v1680
        %v1754 = vpop.f32.mrb[0].mxu0
        %v1755 = vadd.f32 %v1670, %v1754
        %v1756 = vpop.f32.mrb[0].mxu0
        %1757 = vmatprep.mubr.f32.mxu0 0.0
        %1758 = vmatmul.mubr.f32.gmra.mrb[0].mxu0 %v1682
        %v1759 = vpop.f32.mrb[0].mxu0
        %v1760 = vadd.f32 %v1671, %v1759
        %v1761 = vpop.f32.mrb[0].mxu0
        %1762 = vdwg.mxu0
        %1763 = vrot.lane.b32.xlu0 %v419, 104
        %v1764 = vpop.permute.xlu0 %1763
        %1765 = vrot.lane.b32.xlu0 %v420, 104
        %v1766 = vpop.permute.xlu0 %1765
        %1767 = vrot.lane.b32.xlu0 %v423, 104
        %v1768 = vpop.permute.xlu0 %1767
        %1769 = vrot.lane.b32.xlu0 %v424, 104
        %v1770 = vpop.permute.xlu0 %1769
        %v1771 = vsel %vm431, %v1764, 0
        %v1773 = vsel %vm431, %v1766, 0
        %v1775 = vsel %vm431, %v1768, 0
        %v1777 = vsel %vm431, %v1770, 0
        %1779 = vmatprep.subr.mxu0 0.0
        %1780 = vmatpush1.xpose.msra.mxu0 %v1775
        %1781 = vmatprep.subr.mxu0 0.0
        %1782 = vmatpush1.xpose.msra.mxu0 %v1777
        %1783 = vmatprep.subr.mxu0 0.0
        %1784 = vmatpush1.xpose.msra.mxu0 0.0
        %1785 = vmatprep.subr.mxu0 0.0
        %1786 = vmatpush1.xpose.msra.mxu0 0.0
        %1787 = vmatprep.subr.mxu0 0.0
        %1788 = vmatpush1.xpose.msra.mxu0 0.0
        %1789 = vmatprep.subr.mxu0 0.0
        %1790 = vmatpush1.xpose.msra.mxu0 0.0
        %1791 = vmatprep.subr.mxu0 0.0
        %1792 = vmatpush1.xpose.msra.mxu0 0.0
        %1793 = vmatprep.subr.mxu0 0.0
        %1794 = vmatpush1.xpose.msra.mxu0 0.0
        %1795 = vmatprep.subr.mxu0 0.0
        %1796 = vmatpush1.xpose.msra.mxu0 0.0
        %1797 = vmatprep.subr.mxu0 0.0
        %1798 = vmatpush1.xpose.msra.mxu0 0.0
        %1799 = vmatprep.subr.mxu0 0.0
        %1800 = vmatpush1.xpose.msra.mxu0 0.0
        %1801 = vmatprep.subr.mxu0 0.0
        %1802 = vmatpush1.xpose.msra.mxu0 0.0
        %1803 = vmatprep.subr.mxu0 0.0
        %1804 = vmatpush1.xpose.msra.mxu0 0.0
        %1805 = vmatprep.subr.mxu0 0.0
        %1806 = vmatpush1.xpose.msra.mxu0 0.0
        %1807 = vmatprep.subr.mxu0 0.0
        %1808 = vmatpush1.xpose.msra.mxu0 0.0
        %1809 = vmatprep.subr.mxu0 0.0
        %1810 = vmatpush1.xpose.msra.mxu0 0.0
        %1811 = vmatprep.subr.mxu0 0.0
        %1812 = vmatpush1.xpose.msra.mxu0 0.0
        %1813 = vmatprep.subr.mxu0 0.0
        %1814 = vmatpush1.xpose.msra.mxu0 0.0
        %1815 = vmatprep.subr.mxu0 0.0
        %1816 = vmatpush1.xpose.msra.mxu0 0.0
        %1817 = vmatprep.subr.mxu0 0.0
        %1818 = vmatpush1.xpose.msra.mxu0 0.0
        %1819 = vmatprep.subr.mxu0 0.0
        %1820 = vmatpush1.xpose.msra.mxu0 0.0
        %1821 = vmatprep.subr.mxu0 0.0
        %1822 = vmatpush1.xpose.msra.mxu0 0.0
        %1823 = vmatprep.subr.mxu0 0.0
        %1824 = vmatpush1.xpose.msra.mxu0 0.0
        %1825 = vmatprep.subr.mxu0 0.0
        %1826 = vmatpush1.xpose.msra.mxu0 0.0
        %1827 = vmatprep.subr.mxu0 0.0
        %1828 = vmatpush1.xpose.msra.mxu0 0.0
        %1829 = vmatprep.subr.mxu0 0.0
        %1830 = vmatpush1.xpose.msra.mxu0 0.0
        %1831 = vmatprep.subr.mxu0 0.0
        %1832 = vmatpush1.xpose.msra.mxu0 0.0
        %1833 = vmatprep.subr.mxu0 0.0
        %1834 = vmatpush1.xpose.msra.mxu0 0.0
        %1835 = vmatprep.subr.mxu0 0.0
        %1836 = vmatpush1.xpose.msra.mxu0 0.0
        %1837 = vmatprep.subr.mxu0 0.0
        %1838 = vmatpush1.xpose.msra.mxu0 0.0
        %1839 = vmatprep.subr.mxu0 0.0
        %1840 = vmatpush1.xpose.msra.mxu0 0.0
        %1841 = vmatprep.subr.mxu0 0.0
        %1842 = vmatpush1.xpose.msra.mxu0 0.0
        %1843 = vmatprep.mubr.f32.mxu0 0.0
        %1844 = vmatmul.mubr.f32.gmra.mrb[0].mxu0 %v1771
        %v1845 = vpop.f32.mrb[0].mxu0
        %v1846 = vadd.f32 %v1670, %v1845
        %v1847 = vpop.f32.mrb[0].mxu0
        %1848 = vmatprep.mubr.f32.mxu0 0.0
        %1849 = vmatmul.mubr.f32.gmra.mrb[0].mxu0 %v1773
        %v1850 = vpop.f32.mrb[0].mxu0
        %v1851 = vadd.f32 %v1671, %v1850
        %v1852 = vpop.f32.mrb[0].mxu0
        %1853 = vdwg.mxu0
        %v1854 = vsel %vm606, %v1755, -inf
        %1855 = vmax.xlane.f32.xlu0 %v1854
        %v1856 = vpop.xlane.xlu0 %1855
        %v1857 = vsel %vm606, %v1760, -inf
        %1858 = vmax.xlane.f32.xlu0 %v1857
        %v1859 = vpop.xlane.xlu0 %1858
        %v1860 = vsel %vm606, %v1846, -inf
        %1861 = vmax.xlane.f32.xlu0 %v1860
        %v1862 = vpop.xlane.xlu0 %1861
        %v1863 = vsel %vm606, %v1851, -inf
        %1864 = vmax.xlane.f32.xlu0 %v1863
        %v1865 = vpop.xlane.xlu0 %1864
        %v1866 = vsub.f32 %v1755, %v1856
        %v1867 = vsub.f32 %v1760, %v1859
        %v1868 = vsub.f32 %v1846, %v1862
        %v1869 = vsub.f32 %v1851, %v1865
        %v1870 = vmul.f32 %v1866, 1.442695
        %v1871 = vpow.pop %v1870
        %v1872 = vmul.f32 %v1867, 1.442695
        %v1873 = vpow.pop %v1872
        %v1874 = vmul.f32 %v1868, 1.442695
        %v1875 = vpow.pop %v1874
        %v1876 = vmul.f32 %v1869, 1.442695
        %v1877 = vpow.pop %v1876
        %v1878 = vsel %vm606, %v1871, 0.0
        %1879 = vadd.xlane.f32.xlu0 %v1878
        %v1880 = vpop.xlane.xlu0 %1879
        %v1881 = vsel %vm606, %v1873, 0.0
        %1882 = vadd.xlane.f32.xlu0 %v1881
        %v1883 = vpop.xlane.xlu0 %1882
        %v1884 = vsel %vm606, %v1875, 0.0
        %1885 = vadd.xlane.f32.xlu0 %v1884
        %v1886 = vpop.xlane.xlu0 %1885
        %v1887 = vsel %vm606, %v1877, 0.0
        %1888 = vadd.xlane.f32.xlu0 %v1887
        %v1889 = vpop.xlane.xlu0 %1888
        %v1890 = vrcp.pop %v1880
        %v1891 = vmul.f32 %v1871, %v1890
        %v1892 = vrcp.pop %v1883
        %v1893 = vmul.f32 %v1873, %v1892
        %v1894 = vrcp.pop %v1886
        %v1895 = vmul.f32 %v1875, %v1894
        %v1896 = vrcp.pop %v1889
        %v1897 = vmul.f32 %v1877, %v1896
        %1898 = vrot.lane.b32.xlu0 %v425, 104
        %v1899 = vpop.permute.xlu0 %1898
        %1900 = vrot.lane.b32.xlu0 %v426, 104
        %v1901 = vpop.permute.xlu0 %1900
        %v1905 = vsel %vm606, %v1891, 0
        %v1908 = vsel %vm606, %v1893, 0
        %1910 = vmatprep.subr.mxu0 0.0
        %1911 = vmatpush1.msra.mxu0 %v1899
        %1912 = vmatprep.subr.mxu0 0.0
        %1913 = vmatpush1.msra.mxu0 %v1901
        %1914 = vmatprep.subr.mxu0 0.0
        %1915 = vmatpush1.msra.mxu0 0.0
        %1916 = vmatprep.subr.mxu0 0.0
        %1917 = vmatpush1.msra.mxu0 0.0
        %1918 = vmatprep.subr.mxu0 0.0
        %1919 = vmatpush1.msra.mxu0 0.0
        %1920 = vmatprep.subr.mxu0 0.0
        %1921 = vmatpush1.msra.mxu0 0.0
        %1922 = vmatprep.subr.mxu0 0.0
        %1923 = vmatpush1.msra.mxu0 0.0
        %1924 = vmatprep.subr.mxu0 0.0
        %1925 = vmatpush1.msra.mxu0 0.0
        %1926 = vmatprep.subr.mxu0 0.0
        %1927 = vmatpush1.msra.mxu0 0.0
        %1928 = vmatprep.subr.mxu0 0.0
        %1929 = vmatpush1.msra.mxu0 0.0
        %1930 = vmatprep.subr.mxu0 0.0
        %1931 = vmatpush1.msra.mxu0 0.0
        %1932 = vmatprep.subr.mxu0 0.0
        %1933 = vmatpush1.msra.mxu0 0.0
        %1934 = vmatprep.subr.mxu0 0.0
        %1935 = vmatpush1.msra.mxu0 0.0
        %1936 = vmatprep.subr.mxu0 0.0
        %1937 = vmatpush1.msra.mxu0 0.0
        %1938 = vmatprep.subr.mxu0 0.0
        %1939 = vmatpush1.msra.mxu0 0.0
        %1940 = vmatprep.subr.mxu0 0.0
        %1941 = vmatpush1.msra.mxu0 0.0
        %1942 = vmatprep.subr.mxu0 0.0
        %1943 = vmatpush1.msra.mxu0 0.0
        %1944 = vmatprep.subr.mxu0 0.0
        %1945 = vmatpush1.msra.mxu0 0.0
        %1946 = vmatprep.subr.mxu0 0.0
        %1947 = vmatpush1.msra.mxu0 0.0
        %1948 = vmatprep.subr.mxu0 0.0
        %1949 = vmatpush1.msra.mxu0 0.0
        %1950 = vmatprep.subr.mxu0 0.0
        %1951 = vmatpush1.msra.mxu0 0.0
        %1952 = vmatprep.subr.mxu0 0.0
        %1953 = vmatpush1.msra.mxu0 0.0
        %1954 = vmatprep.subr.mxu0 0.0
        %1955 = vmatpush1.msra.mxu0 0.0
        %1956 = vmatprep.subr.mxu0 0.0
        %1957 = vmatpush1.msra.mxu0 0.0
        %1958 = vmatprep.subr.mxu0 0.0
        %1959 = vmatpush1.msra.mxu0 0.0
        %1960 = vmatprep.subr.mxu0 0.0
        %1961 = vmatpush1.msra.mxu0 0.0
        %1962 = vmatprep.subr.mxu0 0.0
        %1963 = vmatpush1.msra.mxu0 0.0
        %1964 = vmatprep.subr.mxu0 0.0
        %1965 = vmatpush1.msra.mxu0 0.0
        %1966 = vmatprep.subr.mxu0 0.0
        %1967 = vmatpush1.msra.mxu0 0.0
        %1968 = vmatprep.subr.mxu0 0.0
        %1969 = vmatpush1.msra.mxu0 0.0
        %1970 = vmatprep.subr.mxu0 0.0
        %1971 = vmatpush1.msra.mxu0 0.0
        %1972 = vmatprep.subr.mxu0 0.0
        %1973 = vmatpush1.msra.mxu0 0.0
        %1974 = vmatprep.mubr.f32.mxu0 0.0
        %1975 = vmatmul.mubr.f32.gmra.mrb[0].mxu0 %v1905
        %v1976 = vpop.f32.mrb[0].mxu0
        %v1977 = vadd.f32 0.0, %v1976
        %v1978 = vpop.f32.mrb[0].mxu0
        %1979 = vmatprep.mubr.f32.mxu0 0.0
        %1980 = vmatmul.mubr.f32.gmra.mrb[0].mxu0 %v1908
        %v1981 = vpop.f32.mrb[0].mxu0
        %v1982 = vadd.f32 0.0, %v1981
        %v1983 = vpop.f32.mrb[0].mxu0
        %1984 = vdwg.mxu0
        %1985 = vrot.lane.b32.xlu0 %v427, 104
        %v1986 = vpop.permute.xlu0 %1985
        %1987 = vrot.lane.b32.xlu0 %v428, 104
        %v1988 = vpop.permute.xlu0 %1987
        %v1992 = vsel %vm606, %v1895, 0
        %v1995 = vsel %vm606, %v1897, 0
        %1997 = vmatprep.subr.mxu0 0.0
        %1998 = vmatpush1.msra.mxu0 %v1986
        %1999 = vmatprep.subr.mxu0 0.0
        %2000 = vmatpush1.msra.mxu0 %v1988
        %2001 = vmatprep.subr.mxu0 0.0
        %2002 = vmatpush1.msra.mxu0 0.0
        %2003 = vmatprep.subr.mxu0 0.0
        %2004 = vmatpush1.msra.mxu0 0.0
        %2005 = vmatprep.subr.mxu0 0.0
        %2006 = vmatpush1.msra.mxu0 0.0
        %2007 = vmatprep.subr.mxu0 0.0
        %2008 = vmatpush1.msra.mxu0 0.0
        %2009 = vmatprep.subr.mxu0 0.0
        %2010 = vmatpush1.msra.mxu0 0.0
        %2011 = vmatprep.subr.mxu0 0.0
        %2012 = vmatpush1.msra.mxu0 0.0
        %2013 = vmatprep.subr.mxu0 0.0
        %2014 = vmatpush1.msra.mxu0 0.0
        %2015 = vmatprep.subr.mxu0 0.0
        %2016 = vmatpush1.msra.mxu0 0.0
        %2017 = vmatprep.subr.mxu0 0.0
        %2018 = vmatpush1.msra.mxu0 0.0
        %2019 = vmatprep.subr.mxu0 0.0
        %2020 = vmatpush1.msra.mxu0 0.0
        %2021 = vmatprep.subr.mxu0 0.0
        %2022 = vmatpush1.msra.mxu0 0.0
        %2023 = vmatprep.subr.mxu0 0.0
        %2024 = vmatpush1.msra.mxu0 0.0
        %2025 = vmatprep.subr.mxu0 0.0
        %2026 = vmatpush1.msra.mxu0 0.0
        %2027 = vmatprep.subr.mxu0 0.0
        %2028 = vmatpush1.msra.mxu0 0.0
        %2029 = vmatprep.subr.mxu0 0.0
        %2030 = vmatpush1.msra.mxu0 0.0
        %2031 = vmatprep.subr.mxu0 0.0
        %2032 = vmatpush1.msra.mxu0 0.0
        %2033 = vmatprep.subr.mxu0 0.0
        %2034 = vmatpush1.msra.mxu0 0.0
        %2035 = vmatprep.subr.mxu0 0.0
        %2036 = vmatpush1.msra.mxu0 0.0
        %2037 = vmatprep.subr.mxu0 0.0
        %2038 = vmatpush1.msra.mxu0 0.0
        %2039 = vmatprep.subr.mxu0 0.0
        %2040 = vmatpush1.msra.mxu0 0.0
        %2041 = vmatprep.subr.mxu0 0.0
        %2042 = vmatpush1.msra.mxu0 0.0
        %2043 = vmatprep.subr.mxu0 0.0
        %2044 = vmatpush1.msra.mxu0 0.0
        %2045 = vmatprep.subr.mxu0 0.0
        %2046 = vmatpush1.msra.mxu0 0.0
        %2047 = vmatprep.subr.mxu0 0.0
        %2048 = vmatpush1.msra.mxu0 0.0
        %2049 = vmatprep.subr.mxu0 0.0
        %2050 = vmatpush1.msra.mxu0 0.0
        %2051 = vmatprep.subr.mxu0 0.0
        %2052 = vmatpush1.msra.mxu0 0.0
        %2053 = vmatprep.subr.mxu0 0.0
        %2054 = vmatpush1.msra.mxu0 0.0
        %2055 = vmatprep.subr.mxu0 0.0
        %2056 = vmatpush1.msra.mxu0 0.0
        %2057 = vmatprep.subr.mxu0 0.0
        %2058 = vmatpush1.msra.mxu0 0.0
        %2059 = vmatprep.subr.mxu0 0.0
        %2060 = vmatpush1.msra.mxu0 0.0
        %2061 = vmatprep.mubr.f32.mxu0 0.0
        %2062 = vmatmul.mubr.f32.gmra.mrb[0].mxu0 %v1992
        %v2063 = vpop.f32.mrb[0].mxu0
        %v2064 = vadd.f32 0.0, %v2063
        %v2065 = vpop.f32.mrb[0].mxu0
        %2066 = vmatprep.mubr.f32.mxu0 0.0
        %2067 = vmatmul.mubr.f32.gmra.mrb[0].mxu0 %v1995
        %v2068 = vpop.f32.mrb[0].mxu0
        %v2069 = vadd.f32 0.0, %v2068
        %v2070 = vpop.f32.mrb[0].mxu0
        %2071 = vdwg.mxu0
        %2076 = vrot.lane.b32.xlu0 %v1977, 24
        %v2077 = vpop.permute.xlu0 %2076
        %2078 = vrot.lane.b32.xlu0 %v1982, 24
        %v2079 = vpop.permute.xlu0 %2078
        %2080 = vrot.lane.b32.xlu0 %v2064, 24
        %v2081 = vpop.permute.xlu0 %2080
        %2082 = vrot.lane.b32.xlu0 %v2069, 24
        %v2083 = vpop.permute.xlu0 %2082
        %vm2088 = vcmask 261312
        %2089 = vst.msk [vmem:[#allocation2] sm:$0xff] %vm2088, %v2077
        %2090 = vst.msk [vmem:[#allocation2 + $0x8] sm:$0xff] %vm2088, %v2079
        %2091 = vst.msk [vmem:[#allocation2 + $0x10] sm:$0xff] %vm2088, %v2081
        %2092 = vst.msk [vmem:[#allocation2 + $0x18] sm:$0xff] %vm2088, %v2083
        %v2093 = vld [vmem:[#allocation2] sm:$0xff]
        %v2094 = vld [vmem:[#allocation2 + $0x8] sm:$0xff]
        %v2095 = vld [vmem:[#allocation2 + $0x10] sm:$0xff]
        %v2096 = vld [vmem:[#allocation2 + $0x18] sm:$0xff]
        %v2097 = vld [vmem:[#allocation12] sm:$0xff]
        %v2098 = vld [vmem:[#allocation12 + $0x8] sm:$0xff]
        %v2099 = vld [vmem:[#allocation12 + $0x10] sm:$0xff]
        %v2100 = vld [vmem:[#allocation12 + $0x18] sm:$0xff]
        %v2101 = vld [vmem:[%s6] sm:$0x1]
        %v2103 = vlaneseq
        %v2104 = vshrl.u32 %v2103, 7
        %v2105 = vsub.s32 0, %v2104
        %v2106 = vrot.slane %v2101, %v2105
        %vm2108 = vcmask 261120
        %v2110 = vsel %vm2108, %v2093, 0
        %v2113 = vsel %vm2108, %v2094, 0
        %v2116 = vsel %vm2108, %v2095, 0
        %v2119 = vsel %vm2108, %v2096, 0
        %v2122 = vsel %vm2108, %v2097, 0
        %v2125 = vsel %vm2108, %v2098, 0
        %v2128 = vsel %vm2108, %v2099, 0
        %v2131 = vsel %vm2108, %v2100, 0
        %2133 = vmatprep.subr.mxu0 0.0
        %2134 = vmatpush1.xpose.msra.mxu0 %v2122
        %2135 = vmatprep.subr.mxu0 0.0
        %2136 = vmatpush1.xpose.msra.mxu0 %v2125
        %2137 = vmatprep.subr.mxu0 0.0
        %2138 = vmatpush1.xpose.msra.mxu0 %v2128
        %2139 = vmatprep.subr.mxu0 0.0
        %2140 = vmatpush1.xpose.msra.mxu0 %v2131
        %2141 = vmatprep.subr.mxu0 0.0
        %2142 = vmatpush1.xpose.msra.mxu0 0.0
        %2143 = vmatprep.subr.mxu0 0.0
        %2144 = vmatpush1.xpose.msra.mxu0 0.0
        %2145 = vmatprep.subr.mxu0 0.0
        %2146 = vmatpush1.xpose.msra.mxu0 0.0
        %2147 = vmatprep.subr.mxu0 0.0
        %2148 = vmatpush1.xpose.msra.mxu0 0.0
        %2149 = vmatprep.subr.mxu0 0.0
        %2150 = vmatpush1.xpose.msra.mxu0 0.0
        %2151 = vmatprep.subr.mxu0 0.0
        %2152 = vmatpush1.xpose.msra.mxu0 0.0
        %2153 = vmatprep.subr.mxu0 0.0
        %2154 = vmatpush1.xpose.msra.mxu0 0.0
        %2155 = vmatprep.subr.mxu0 0.0
        %2156 = vmatpush1.xpose.msra.mxu0 0.0
        %2157 = vmatprep.subr.mxu0 0.0
        %2158 = vmatpush1.xpose.msra.mxu0 0.0
        %2159 = vmatprep.subr.mxu0 0.0
        %2160 = vmatpush1.xpose.msra.mxu0 0.0
        %2161 = vmatprep.subr.mxu0 0.0
        %2162 = vmatpush1.xpose.msra.mxu0 0.0
        %2163 = vmatprep.subr.mxu0 0.0
        %2164 = vmatpush1.xpose.msra.mxu0 0.0
        %2165 = vmatprep.subr.mxu0 0.0
        %2166 = vmatpush1.xpose.msra.mxu0 0.0
        %2167 = vmatprep.subr.mxu0 0.0
        %2168 = vmatpush1.xpose.msra.mxu0 0.0
        %2169 = vmatprep.subr.mxu0 0.0
        %2170 = vmatpush1.xpose.msra.mxu0 0.0
        %2171 = vmatprep.subr.mxu0 0.0
        %2172 = vmatpush1.xpose.msra.mxu0 0.0
        %2173 = vmatprep.subr.mxu0 0.0
        %2174 = vmatpush1.xpose.msra.mxu0 0.0
        %2175 = vmatprep.subr.mxu0 0.0
        %2176 = vmatpush1.xpose.msra.mxu0 0.0
        %2177 = vmatprep.subr.mxu0 0.0
        %2178 = vmatpush1.xpose.msra.mxu0 0.0
        %2179 = vmatprep.subr.mxu0 0.0
        %2180 = vmatpush1.xpose.msra.mxu0 0.0
        %2181 = vmatprep.subr.mxu0 0.0
        %2182 = vmatpush1.xpose.msra.mxu0 0.0
        %2183 = vmatprep.subr.mxu0 0.0
        %2184 = vmatpush1.xpose.msra.mxu0 0.0
        %2185 = vmatprep.subr.mxu0 0.0
        %2186 = vmatpush1.xpose.msra.mxu0 0.0
        %2187 = vmatprep.subr.mxu0 0.0
        %2188 = vmatpush1.xpose.msra.mxu0 0.0
        %2189 = vmatprep.subr.mxu0 0.0
        %2190 = vmatpush1.xpose.msra.mxu0 0.0
        %2191 = vmatprep.subr.mxu0 0.0
        %2192 = vmatpush1.xpose.msra.mxu0 0.0
        %2193 = vmatprep.subr.mxu0 0.0
        %2194 = vmatpush1.xpose.msra.mxu0 0.0
        %2195 = vmatprep.subr.mxu0 0.0
        %2196 = vmatpush1.xpose.msra.mxu0 0.0
        %2197 = vmatprep.mubr.f32.mxu0 0.0
        %2198 = vmatmul.mubr.f32.gmra.mrb[0].mxu0 %v2110
        %v2199 = vpop.f32.mrb[0].mxu0
        %v2200 = vadd.f32 %v2106, %v2199
        %v2201 = vpop.f32.mrb[0].mxu0
        %2202 = vmatprep.mubr.f32.mxu0 0.0
        %2203 = vmatmul.mubr.f32.gmra.mrb[0].mxu0 %v2113
        %v2204 = vpop.f32.mrb[0].mxu0
        %v2205 = vadd.f32 %v2106, %v2204
        %v2206 = vpop.f32.mrb[0].mxu0
        %2207 = vmatprep.mubr.f32.mxu0 0.0
        %2208 = vmatmul.mubr.f32.gmra.mrb[0].mxu0 %v2116
        %v2209 = vpop.f32.mrb[0].mxu0
        %v2210 = vadd.f32 %v2106, %v2209
        %v2211 = vpop.f32.mrb[0].mxu0
        %2212 = vmatprep.mubr.f32.mxu0 0.0
        %2213 = vmatmul.mubr.f32.gmra.mrb[0].mxu0 %v2119
        %v2214 = vpop.f32.mrb[0].mxu0
        %v2215 = vadd.f32 %v2106, %v2214
        %v2216 = vpop.f32.mrb[0].mxu0
        %2217 = vdwg.mxu0
        %2218 = vst.msk [vmem:[%s406] sm:$0xff] %vm2108, %v2200
        %2219 = vst.msk [vmem:[%s406 + $0x8] sm:$0xff] %vm2108, %v2205
        %2220 = vst.msk [vmem:[%s406 + $0x10] sm:$0xff] %vm2108, %v2210
        %2221 = vst.msk [vmem:[%s406 + $0x18] sm:$0xff] %vm2108, %v2215
        %s2222 = sand.u32 %s199, 1
        %s2223 = scalar_lea.sflag [#allocation6], %s2222
        %s2224 = sand.u32 %s199, 1
        %s2225 = smul.addr %s2224, 32
        %s2226 = scalar_lea.vmem [#allocation13], %s2225
        // Predicated region
        $region69: #{tpu_custom_call.1} parent=47 // pred_check
          %p2227 = pneg %p209
        $region70: #{tpu_custom_call.1} parent=47 // pred_check_branch
          %2229 = sbr.rel (%p2227) target = $region72
        $region71: #{tpu_custom_call.1} parent=47 // pred_region
          %s2230 = smul.u32 2, %s29
          %s2232 = ssub.s32 512, 512
          %2233 = vsyncadd %s2223, %s2232
          %s2234 = smul.addr %s2230, 2
          %s2235 = smul.addr %s2234, 128
          %s2236 = scalar_lea.hbm %s7, %s2235
          %s2237 = sshll.u32 %s2226, 4
          %s2238 = int_to_ptr.vmem [resolvable:$true] %s2237
          %2243 = dma.vmem_to_hbm [thread:$0]  %s2238, 512, %s2236, %s2223, 128, 128, 8
        $region72: #{tpu_custom_call.1} parent=47 // pred_fallthru
          _
      $region48: #{tpu_custom_call.1} parent=5 // pred_fallthru
        _
      %p2244 = scmp.le.s32.totalorder 2, %s24
      // Predicated region
      $region73: #{tpu_custom_call.1} parent=5 // pred_check
        %p2245 = pneg %p2244
      $region74: #{tpu_custom_call.1} parent=5 // pred_check_branch
        %2247 = sbr.rel (%p2245) target = $region76
      $region75: #{tpu_custom_call.1} parent=5 // pred_region
        %s2248 = ssub.s32 %s24, 2
        // Predicated region
        $region77: #{tpu_custom_call.1} parent=75 // pred_check
          %p2249 = pneg %p215
        $region78: #{tpu_custom_call.1} parent=75 // pred_check_branch
          %2251 = sbr.rel (%p2249) target = $region80
        $region79: #{tpu_custom_call.1} parent=75 // pred_region
          %s2252 = sand.u32 %s200, 1
          %s2253 = scalar_lea.sflag [#allocation6], %s2252
          %s2254 = sand.u32 %s200, 1
          %s2255 = smul.addr %s2254, 32
          %s2256 = scalar_lea.vmem [#allocation13], %s2255
          %2257 = dma.done %s2253, 512
        $region80: #{tpu_custom_call.1} parent=75 // pred_fallthru
          _
      $region76: #{tpu_custom_call.1} parent=5 // pred_fallthru
        _
    $region6: #{tpu_custom_call.1} parent=1 // loop_footer
      %s28 = sadd.s32 1, %s24
    $region7: #{tpu_custom_call.1} parent=1 // loop_footer_branch
      %23 = sbr.rel target = $region3
    $region8: #{tpu_custom_call.1} parent=1 // loop_exit
      _
    %2258 = vsyncpa [#allocation5], 1
    %s2259 = scalar_lea.sflag [#allocation5], 1
    %2260 = vsyncpa %s2259, 1
    %2261 = vsyncpa [#allocation8], 1
    %s2262 = scalar_lea.sflag [#allocation8], 1
    %2263 = vsyncpa %s2262, 1
    %2264 = vsyncpa [#allocation11], 1
    %2265 = vsyncpa [#allocation6], 1
    %s2266 = scalar_lea.sflag [#allocation6], 1
    %2267 = vsyncpa %s2266, 1

</llo_original>
